<compile_context>
chip_gen: v7x
topology: tpu7x:2x2x1
jax: 0.10.0
libtpu: 0.0.40
codegen_flags: <defaults>
</compile_context>

<pallas_src>
import functools

import jax
import jax.numpy as jnp
from jax import lax
from jax.experimental import pallas as pl
from jax.experimental.pallas import tpu as pltpu

EPS = 1e-5
LANE = 128                      # lane width: pad Cout and K=9*Cin to multiples
VMEM_LIMIT = 48 * 1024 * 1024   # fits under v7x's 64 MiB physical VMEM


def _round_up(x, m):
    return ((x + m - 1) // m) * m


# ---------------------------------------------------------------------------
# Pass 1: conv matmul + per-channel batch-stat accumulation.
#   p_ref     : (TM, Kpad)   bf16 im2col patch tile
#   w_ref     : (Kpad, Cpad) bf16 weights (resident: constant index_map)
#   gamma_ref : (1, Cpad)    f32 BN gamma (zeros in padded columns)
#   beta_ref  : (1, Cpad)    f32 BN beta
#   conv_ref  : (TM, Cpad)   f32 conv output tile
#   scale_ref : (1, Cpad)    f32 folded BN scale  (written on last tile)
#   shift_ref : (1, Cpad)    f32 folded BN shift  (written on last tile)
#   sum_ref, ssq_ref : (1, Cpad) f32 VMEM scratch accumulators
# ---------------------------------------------------------------------------
def _conv_stats_kernel(p_ref, w_ref, gamma_ref, beta_ref,
                       conv_ref, scale_ref, shift_ref,
                       sum_ref, ssq_ref, *, inv_m):
    i = pl.program_id(0)

    @pl.when(i == 0)
    def _():
        sum_ref[...] = jnp.zeros_like(sum_ref)
        ssq_ref[...] = jnp.zeros_like(ssq_ref)

    # Single MXU matmul, bf16 operands, f32 accumulation.
    acc = jnp.dot(p_ref[...], w_ref[...], preferred_element_type=jnp.float32)
    conv_ref[...] = acc

    # One-pass stats: column reductions (XLU slot, off the VALU critical path).
    # Padded/zero rows contribute 0, so inv_m uses the real row count.
    sum_ref[...] += jnp.sum(acc, axis=0, keepdims=True)
    ssq_ref[...] += jnp.sum(acc * acc, axis=0, keepdims=True)

    @pl.when(i == pl.num_programs(0) - 1)
    def _():
        mean = sum_ref[...] * inv_m
        var = ssq_ref[...] * inv_m - mean * mean
        var = jnp.maximum(var, 0.0)                 # guard E[x^2]-E[x]^2 cancel
        inv_std = lax.rsqrt(var + EPS)              # EUP, effectively free
        scale = gamma_ref[...] * inv_std            # padded gamma=0 -> scale=0
        scale_ref[...] = scale
        shift_ref[...] = beta_ref[...] - mean * scale


# ---------------------------------------------------------------------------
# Pass 2: apply folded BN affine + ReLU (pure elementwise, fully parallel).
# ---------------------------------------------------------------------------
def _bn_relu_kernel(conv_ref, scale_ref, shift_ref, o_ref):
    y = conv_ref[...] * scale_ref[...] + shift_ref[...]
    o_ref[...] = jnp.maximum(y, 0.0).astype(o_ref.dtype)


# ---------------------------------------------------------------------------
# XLA glue: im2col for a 3x3 convolution with padding=1.
#   (N, H, W, C) -> (N*H*W, 9*C), tap order (dy, dx, c) matching the HWIO
#   weight flattened as reshape(9*C, Cout).
# ---------------------------------------------------------------------------
def _im2col_3x3(x_nhwc):
    n, h, w, c = x_nhwc.shape
    xp = jnp.pad(x_nhwc, ((0, 0), (1, 1), (1, 1), (0, 0)))
    cols = [xp[:, dy:dy + h, dx:dx + w, :]
            for dy in range(3) for dx in range(3)]
    patches = jnp.concatenate(cols, axis=-1)          # (N, H, W, 9*C)
    return patches.reshape(n * h * w, 9 * c)


# ---------------------------------------------------------------------------
# One Conv3x3(pad=1, bias folded) + BN(batch stats) + ReLU layer.
#   tm: M tile size.  Sweep per generation (smaller on v7x: 64 MiB VMEM).
# ---------------------------------------------------------------------------
def conv_bn_relu(x_nhwc, w_hwio, gamma, beta, *, tm=256):
    n, h, w, cin = x_nhwc.shape
    cout = w_hwio.shape[-1]
    # NOTE: for Cout in (128, 256] on v6e/v7x, padding straight to 256 keeps
    # the full 256-wide MXU output dimension busy; toy Cout=8 -> Cpad=128.
    cpad = _round_up(cout, LANE)
    k = 9 * cin
    kpad = _round_up(k, LANE)

    m = n * h * w
    tm = max(8, min(tm, _round_up(m, 8)))
    m_pad = _round_up(m, tm)
    grid = (m_pad // tm,)

    # --- wrapper-side glue: im2col, bf16 casts, zero-padding to lane multiples
    patches = _im2col_3x3(x_nhwc).astype(jnp.bfloat16)            # (m, k)
    p_pad = jnp.zeros((m_pad, kpad), jnp.bfloat16).at[:m, :k].set(patches)
    w2d = w_hwio.reshape(k, cout).astype(jnp.bfloat16)
    w_pad = jnp.zeros((kpad, cpad), jnp.bfloat16).at[:k, :cout].set(w2d)
    g_pad = jnp.zeros((1, cpad), jnp.float32).at[:, :cout].set(
        gamma.astype(jnp.float32)[None, :])
    b_pad = jnp.zeros((1, cpad), jnp.float32).at[:, :cout].set(
        beta.astype(jnp.float32)[None, :])

    # --- pass 1: conv + stats (M axis is a reduction for the stats -> arbitrary)
    conv2d, scale, shift = pl.pallas_call(
        functools.partial(_conv_stats_kernel, inv_m=1.0 / m),
        out_shape=(jax.ShapeDtypeStruct((m_pad, cpad), jnp.float32),
                   jax.ShapeDtypeStruct((1, cpad), jnp.float32),
                   jax.ShapeDtypeStruct((1, cpad), jnp.float32)),
        grid_spec=pltpu.PrefetchScalarGridSpec(
            num_scalar_prefetch=0,
            grid=grid,
            in_specs=[pl.BlockSpec((tm, kpad), lambda i: (i, 0)),
                      pl.BlockSpec((kpad, cpad), lambda i: (0, 0)),
                      pl.BlockSpec((1, cpad), lambda i: (0, 0)),
                      pl.BlockSpec((1, cpad), lambda i: (0, 0))],
            out_specs=[pl.BlockSpec((tm, cpad), lambda i: (i, 0)),
                       pl.BlockSpec((1, cpad), lambda i: (0, 0)),
                       pl.BlockSpec((1, cpad), lambda i: (0, 0))],
            scratch_shapes=[pltpu.VMEM((1, cpad), jnp.float32),
                            pltpu.VMEM((1, cpad), jnp.float32)]),
        compiler_params=pltpu.CompilerParams(
            dimension_semantics=("arbitrary",),
            vmem_limit_bytes=VMEM_LIMIT),
    )(p_pad, w_pad, g_pad, b_pad)

    # --- pass 2: BN apply + ReLU (independent rows -> parallel, 2 TCs on v7x)
    out2d = pl.pallas_call(
        _bn_relu_kernel,
        out_shape=jax.ShapeDtypeStruct((m_pad, cpad), jnp.bfloat16),
        grid_spec=pltpu.PrefetchScalarGridSpec(
            num_scalar_prefetch=0,
            grid=grid,
            in_specs=[pl.BlockSpec((tm, cpad), lambda i: (i, 0)),
                      pl.BlockSpec((1, cpad), lambda i: (0, 0)),
                      pl.BlockSpec((1, cpad), lambda i: (0, 0))],
            out_specs=pl.BlockSpec((tm, cpad), lambda i: (i, 0))),
        compiler_params=pltpu.CompilerParams(
            dimension_semantics=("parallel",),
            vmem_limit_bytes=VMEM_LIMIT),
    )(conv2d, scale, shift)

    # Row/channel de-padding + reshape back to NHWC (wrapper glue).
    return out2d[:m, :cout].reshape(n, h, w, cout)


# ---------------------------------------------------------------------------
# DoubleConv forward: (Conv3x3 + BN + ReLU) x 2.  NCHW in / NCHW out; layout
# transposes and the bf16 -> module-dtype cast happen once at the boundary.
# ---------------------------------------------------------------------------
def double_conv_forward(x_nchw, params):
    x = jnp.transpose(x_nchw, (0, 2, 3, 1))           # NCHW -> NHWC (once)
    x = conv_bn_relu(x, params["w1"], params["gamma1"], params["beta1"])
    x = conv_bn_relu(x, params["w2"], params["gamma2"], params["beta2"])
    x = jnp.transpose(x, (0, 3, 1, 2))                # NHWC -> NCHW (once)
    return x.astype(x_nchw.dtype)


def init_params(key, in_channels, out_channels, mid_channels=None):
    if mid_channels is None:
        mid_channels = out_channels
    k1, k2 = jax.random.split(key, 2)
    # Conv weights in HWIO layout (3, 3, Cin, Cout).  No bias: a per-channel
    # bias before batch-stat BatchNorm is exactly cancelled by the mean
    # subtraction, so it is dead compute (training-mode forward semantics).
    w1 = 0.1 * jax.random.normal(k1, (3, 3, in_channels, mid_channels),
                                 jnp.float32)
    w2 = 0.1 * jax.random.normal(k2, (3, 3, mid_channels, out_channels),
                                 jnp.float32)
    return {
        "w1": w1,
        "gamma1": jnp.ones((mid_channels,), jnp.float32),
        "beta1": jnp.zeros((mid_channels,), jnp.float32),
        "w2": w2,
        "gamma2": jnp.ones((out_channels,), jnp.float32),
        "beta2": jnp.zeros((out_channels,), jnp.float32),
    }


if __name__ == "__main__":
    key = jax.random.PRNGKey(0)
    kx, kp = jax.random.split(key)

    in_channels, out_channels = 4, 8
    x = jax.random.normal(kx, (2, in_channels, 16, 16), jnp.float32)  # NCHW
    params = init_params(kp, in_channels, out_channels)

    fwd = jax.jit(double_conv_forward)
    out = jax.block_until_ready(fwd(x, params))

    assert out.shape == (2, out_channels, 16, 16), out.shape
    assert out.dtype == x.dtype, out.dtype
    assert bool(jnp.all(jnp.isfinite(out)))
    print("KERNEL_OK")
</pallas_src>

<mosaic_0001>
module attributes {stable_mosaic.version = 11 : i64} {
  func.func @_conv_stats_kernel(%arg0: i32, %arg1: memref<256x128xbf16, #tpu.memory_space<vmem>>, %arg2: memref<128x128xbf16, #tpu.memory_space<vmem>>, %arg3: memref<1x128xf32, #tpu.memory_space<vmem>>, %arg4: memref<1x128xf32, #tpu.memory_space<vmem>>, %arg5: memref<256x128xf32, #tpu.memory_space<vmem>>, %arg6: memref<1x128xf32, #tpu.memory_space<vmem>>, %arg7: memref<1x128xf32, #tpu.memory_space<vmem>>, %arg8: memref<1x128xf32, #tpu.memory_space<vmem>>, %arg9: memref<1x128xf32, #tpu.memory_space<vmem>>) attributes {dimension_semantics = [#tpu.dimension_semantics<arbitrary>], iteration_bounds = array<i64: 2>, scalar_prefetch = 0 : i64, scratch_operands = 2 : i64, tpu.core_type = #tpu.core_type<tc>, window_params = [{transform_indices = @transform_0, window_bounds = array<i64: 256, 128>}, {pipeline_mode = #tpu.pipeline_mode<synchronous>, transform_indices = @transform_1, window_bounds = array<i64: 128, 128>}, {pipeline_mode = #tpu.pipeline_mode<synchronous>, transform_indices = @transform_2, window_bounds = array<i64: 1, 128>}, {pipeline_mode = #tpu.pipeline_mode<synchronous>, transform_indices = @transform_3, window_bounds = array<i64: 1, 128>}, {transform_indices = @transform_4, window_bounds = array<i64: 256, 128>}, {pipeline_mode = #tpu.pipeline_mode<synchronous>, transform_indices = @transform_5, window_bounds = array<i64: 1, 128>}, {pipeline_mode = #tpu.pipeline_mode<synchronous>, transform_indices = @transform_6, window_bounds = array<i64: 1, 128>}]} {
    %c0_i32 = arith.constant 0 : i32
    %0 = arith.cmpi eq, %arg0, %c0_i32 : i32
    %1 = arith.extui %0 : i1 to i32
    %c0_i32_0 = arith.constant 0 : i32
    %2 = arith.cmpi ne, %1, %c0_i32_0 : i32
    scf.if %2 {
      %cst_17 = arith.constant 0.000000e+00 : f32
      %21 = vector.broadcast %cst_17 : f32 to vector<1x128xf32>
      %c0_18 = arith.constant 0 : index
      %c0_19 = arith.constant 0 : index
      %22 = vector.load %arg8[%c0_18, %c0_19] : memref<1x128xf32, #tpu.memory_space<vmem>>, vector<1x128xf32>
      tpu.vector_store %arg8[%c0_18, %c0_19], %21 {strides = array<i32>} : memref<1x128xf32, #tpu.memory_space<vmem>>, vector<1x128xf32>,
      %cst_20 = arith.constant 0.000000e+00 : f32
      %23 = vector.broadcast %cst_20 : f32 to vector<1x128xf32>
      %c0_21 = arith.constant 0 : index
      %c0_22 = arith.constant 0 : index
      %24 = vector.load %arg9[%c0_21, %c0_22] : memref<1x128xf32, #tpu.memory_space<vmem>>, vector<1x128xf32>
      tpu.vector_store %arg9[%c0_21, %c0_22], %23 {strides = array<i32>} : memref<1x128xf32, #tpu.memory_space<vmem>>, vector<1x128xf32>,
    } else {
    }
    %c0 = arith.constant 0 : index
    %c0_1 = arith.constant 0 : index
    %3 = vector.load %arg1[%c0, %c0_1] : memref<256x128xbf16, #tpu.memory_space<vmem>>, vector<256x128xbf16>
    %c0_2 = arith.constant 0 : index
    %c0_3 = arith.constant 0 : index
    %4 = vector.load %arg2[%c0_2, %c0_3] : memref<128x128xbf16, #tpu.memory_space<vmem>>, vector<128x128xbf16>
    %cst = arith.constant dense<0.000000e+00> : vector<256x128xf32>
    %5 = tpu.matmul %3, %4, %cst {dimension_numbers = #tpu.dot_dimension_numbers<[1], [0], [0], [1], [0, 0, 1, 1], [], []>} : vector<256x128xbf16>, vector<128x128xbf16>, vector<256x128xf32> -> vector<256x128xf32>
    %c0_4 = arith.constant 0 : index
    %c0_5 = arith.constant 0 : index
    %6 = vector.load %arg5[%c0_4, %c0_5] : memref<256x128xf32, #tpu.memory_space<vmem>>, vector<256x128xf32>
    tpu.vector_store %arg5[%c0_4, %c0_5], %5 {strides = array<i32>} : memref<256x128xf32, #tpu.memory_space<vmem>>, vector<256x128xf32>,
    %c0_6 = arith.constant 0 : index
    %c0_7 = arith.constant 0 : index
    %7 = vector.load %arg8[%c0_6, %c0_7] : memref<1x128xf32, #tpu.memory_space<vmem>>, vector<1x128xf32>
    %cst_8 = arith.constant dense<0.000000e+00> : vector<128xf32>
    %8 = vector.multi_reduction <add>, %5, %cst_8 [0] : vector<256x128xf32> to vector<128xf32>
    %9 = vector.shape_cast %8 : vector<128xf32> to vector<1x128xf32>
    %10 = arith.addf %7, %9 : vector<1x128xf32>
    %c0_9 = arith.constant 0 : index
    %c0_10 = arith.constant 0 : index
    %11 = vector.load %arg8[%c0_9, %c0_10] : memref<1x128xf32, #tpu.memory_space<vmem>>, vector<1x128xf32>
    tpu.vector_store %arg8[%c0_9, %c0_10], %10 {strides = array<i32>} : memref<1x128xf32, #tpu.memory_space<vmem>>, vector<1x128xf32>,
    %c0_11 = arith.constant 0 : index
    %c0_12 = arith.constant 0 : index
    %12 = vector.load %arg9[%c0_11, %c0_12] : memref<1x128xf32, #tpu.memory_space<vmem>>, vector<1x128xf32>
    %13 = arith.mulf %5, %5 : vector<256x128xf32>
    %cst_13 = arith.constant dense<0.000000e+00> : vector<128xf32>
    %14 = vector.multi_reduction <add>, %13, %cst_13 [0] : vector<256x128xf32> to vector<128xf32>
    %15 = vector.shape_cast %14 : vector<128xf32> to vector<1x128xf32>
    %16 = arith.addf %12, %15 : vector<1x128xf32>
    %c0_14 = arith.constant 0 : index
    %c0_15 = arith.constant 0 : index
    %17 = vector.load %arg9[%c0_14, %c0_15] : memref<1x128xf32, #tpu.memory_space<vmem>>, vector<1x128xf32>
    tpu.vector_store %arg9[%c0_14, %c0_15], %16 {strides = array<i32>} : memref<1x128xf32, #tpu.memory_space<vmem>>, vector<1x128xf32>,
    %c1_i32 = arith.constant 1 : i32
    %18 = arith.cmpi eq, %arg0, %c1_i32 : i32
    %19 = arith.extui %18 : i1 to i32
    %c0_i32_16 = arith.constant 0 : i32
    %20 = arith.cmpi ne, %19, %c0_i32_16 : i32
    scf.if %20 {
      %c0_17 = arith.constant 0 : index
      %c0_18 = arith.constant 0 : index
      %21 = vector.load %arg8[%c0_17, %c0_18] : memref<1x128xf32, #tpu.memory_space<vmem>>, vector<1x128xf32>
      %cst_19 = arith.constant 0.001953125 : f32
      %22 = vector.broadcast %cst_19 : f32 to vector<1x128xf32>
      %23 = arith.mulf %21, %22 : vector<1x128xf32>
      %c0_20 = arith.constant 0 : index
      %c0_21 = arith.constant 0 : index
      %24 = vector.load %arg9[%c0_20, %c0_21] : memref<1x128xf32, #tpu.memory_space<vmem>>, vector<1x128xf32>
      %cst_22 = arith.constant 0.001953125 : f32
      %25 = vector.broadcast %cst_22 : f32 to vector<1x128xf32>
      %26 = arith.mulf %24, %25 : vector<1x128xf32>
      %27 = arith.mulf %23, %23 : vector<1x128xf32>
      %28 = arith.subf %26, %27 : vector<1x128xf32>
      %cst_23 = arith.constant 0.000000e+00 : f32
      %29 = vector.broadcast %cst_23 : f32 to vector<1x128xf32>
      %30 = arith.maximumf %28, %29 : vector<1x128xf32>
      %cst_24 = arith.constant 9.99999974E-6 : f32
      %31 = vector.broadcast %cst_24 : f32 to vector<1x128xf32>
      %32 = arith.addf %30, %31 : vector<1x128xf32>
      %33 = math.rsqrt %32 : vector<1x128xf32>
      %c0_25 = arith.constant 0 : index
      %c0_26 = arith.constant 0 : index
      %34 = vector.load %arg3[%c0_25, %c0_26] : memref<1x128xf32, #tpu.memory_space<vmem>>, vector<1x128xf32>
      %35 = arith.mulf %34, %33 : vector<1x128xf32>
      %c0_27 = arith.constant 0 : index
      %c0_28 = arith.constant 0 : index
      %36 = vector.load %arg6[%c0_27, %c0_28] : memref<1x128xf32, #tpu.memory_space<vmem>>, vector<1x128xf32>
      tpu.vector_store %arg6[%c0_27, %c0_28], %35 {strides = array<i32>} : memref<1x128xf32, #tpu.memory_space<vmem>>, vector<1x128xf32>,
      %c0_29 = arith.constant 0 : index
      %c0_30 = arith.constant 0 : index
      %37 = vector.load %arg4[%c0_29, %c0_30] : memref<1x128xf32, #tpu.memory_space<vmem>>, vector<1x128xf32>
      %38 = arith.mulf %23, %35 : vector<1x128xf32>
      %39 = arith.subf %37, %38 : vector<1x128xf32>
      %c0_31 = arith.constant 0 : index
      %c0_32 = arith.constant 0 : index
      %40 = vector.load %arg7[%c0_31, %c0_32] : memref<1x128xf32, #tpu.memory_space<vmem>>, vector<1x128xf32>
      tpu.vector_store %arg7[%c0_31, %c0_32], %39 {strides = array<i32>} : memref<1x128xf32, #tpu.memory_space<vmem>>, vector<1x128xf32>,
    } else {
    }
    return
  }
  func.func @transform_0(%arg0: i32) -> (i32, i32) {
    %c0_i32 = arith.constant 0 : i32
    %c0_i32_0 = arith.constant 0 : i32
    return %arg0, %c0_i32 : i32, i32
  }
  func.func @transform_1(%arg0: i32) -> (i32, i32) {
    %c0_i32 = arith.constant 0 : i32
    %c0_i32_0 = arith.constant 0 : i32
    %c0_i32_1 = arith.constant 0 : i32
    return %c0_i32, %c0_i32_0 : i32, i32
  }
  func.func @transform_2(%arg0: i32) -> (i32, i32) {
    %c0_i32 = arith.constant 0 : i32
    %c0_i32_0 = arith.constant 0 : i32
    %c0_i32_1 = arith.constant 0 : i32
    return %c0_i32, %c0_i32_0 : i32, i32
  }
  func.func @transform_3(%arg0: i32) -> (i32, i32) {
    %c0_i32 = arith.constant 0 : i32
    %c0_i32_0 = arith.constant 0 : i32
    %c0_i32_1 = arith.constant 0 : i32
    return %c0_i32, %c0_i32_0 : i32, i32
  }
  func.func @transform_4(%arg0: i32) -> (i32, i32) {
    %c0_i32 = arith.constant 0 : i32
    %c0_i32_0 = arith.constant 0 : i32
    return %arg0, %c0_i32 : i32, i32
  }
  func.func @transform_5(%arg0: i32) -> (i32, i32) {
    %c0_i32 = arith.constant 0 : i32
    %c0_i32_0 = arith.constant 0 : i32
    %c0_i32_1 = arith.constant 0 : i32
    return %c0_i32, %c0_i32_0 : i32, i32
  }
  func.func @transform_6(%arg0: i32) -> (i32, i32) {
    %c0_i32 = arith.constant 0 : i32
    %c0_i32_0 = arith.constant 0 : i32
    %c0_i32_1 = arith.constant 0 : i32
    return %c0_i32, %c0_i32_0 : i32, i32
  }
}

module attributes {stable_mosaic.version = 11 : i64} {
  func.func @_bn_relu_kernel(%arg0: i32, %arg1: memref<256x128xf32, #tpu.memory_space<vmem>>, %arg2: memref<1x128xf32, #tpu.memory_space<vmem>>, %arg3: memref<1x128xf32, #tpu.memory_space<vmem>>, %arg4: memref<256x128xbf16, #tpu.memory_space<vmem>>) attributes {dimension_semantics = [#tpu.dimension_semantics<parallel>], iteration_bounds = array<i64: 2>, scalar_prefetch = 0 : i64, scratch_operands = 0 : i64, tpu.core_type = #tpu.core_type<tc>, window_params = [{transform_indices = @transform_0, window_bounds = array<i64: 256, 128>}, {pipeline_mode = #tpu.pipeline_mode<synchronous>, transform_indices = @transform_1, window_bounds = array<i64: 1, 128>}, {pipeline_mode = #tpu.pipeline_mode<synchronous>, transform_indices = @transform_2, window_bounds = array<i64: 1, 128>}, {transform_indices = @transform_3, window_bounds = array<i64: 256, 128>}]} {
    %c0 = arith.constant 0 : index
    %c0_0 = arith.constant 0 : index
    %0 = vector.load %arg1[%c0, %c0_0] : memref<256x128xf32, #tpu.memory_space<vmem>>, vector<256x128xf32>
    %c0_1 = arith.constant 0 : index
    %c0_2 = arith.constant 0 : index
    %1 = vector.load %arg2[%c0_1, %c0_2] : memref<1x128xf32, #tpu.memory_space<vmem>>, vector<1x128xf32>
    %2 = vector.broadcast %1 : vector<1x128xf32> to vector<256x128xf32>
    %3 = arith.mulf %0, %2 : vector<256x128xf32>
    %c0_3 = arith.constant 0 : index
    %c0_4 = arith.constant 0 : index
    %4 = vector.load %arg3[%c0_3, %c0_4] : memref<1x128xf32, #tpu.memory_space<vmem>>, vector<1x128xf32>
    %5 = vector.broadcast %4 : vector<1x128xf32> to vector<256x128xf32>
    %6 = arith.addf %3, %5 : vector<256x128xf32>
    %cst = arith.constant 0.000000e+00 : f32
    %7 = vector.broadcast %cst : f32 to vector<256x128xf32>
    %8 = arith.maximumf %6, %7 : vector<256x128xf32>
    %9 = arith.truncf %8 : vector<256x128xf32> to vector<256x128xbf16>
    %c0_5 = arith.constant 0 : index
    %c0_6 = arith.constant 0 : index
    %10 = vector.load %arg4[%c0_5, %c0_6] : memref<256x128xbf16, #tpu.memory_space<vmem>>, vector<256x128xbf16>
    tpu.vector_store %arg4[%c0_5, %c0_6], %9 {strides = array<i32>} : memref<256x128xbf16, #tpu.memory_space<vmem>>, vector<256x128xbf16>,
    return
  }
  func.func @transform_0(%arg0: i32) -> (i32, i32) {
    %c0_i32 = arith.constant 0 : i32
    %c0_i32_0 = arith.constant 0 : i32
    return %arg0, %c0_i32 : i32, i32
  }
  func.func @transform_1(%arg0: i32) -> (i32, i32) {
    %c0_i32 = arith.constant 0 : i32
    %c0_i32_0 = arith.constant 0 : i32
    %c0_i32_1 = arith.constant 0 : i32
    return %c0_i32, %c0_i32_0 : i32, i32
  }
  func.func @transform_2(%arg0: i32) -> (i32, i32) {
    %c0_i32 = arith.constant 0 : i32
    %c0_i32_0 = arith.constant 0 : i32
    %c0_i32_1 = arith.constant 0 : i32
    return %c0_i32, %c0_i32_0 : i32, i32
  }
  func.func @transform_3(%arg0: i32) -> (i32, i32) {
    %c0_i32 = arith.constant 0 : i32
    %c0_i32_0 = arith.constant 0 : i32
    return %arg0, %c0_i32 : i32, i32
  }
}

</mosaic_0001>

<llo_original>
// kernel: double_conv_forward.4
$region0: #{double_conv_forward.4}
  #allocation0 [shape = 'u32[]', space=smem, size = 0x4, offset = 0x4, fixed_abs, tag = 'smem constant byte address 0x4 - core index']
  #allocation1 [shape = 'u32[144,128]{1,0:T(1,128)}', space=vmem, size = 0x12000, scoped, tag = 'internal scratch']
  #allocation2 [shape = 'f32[1,128]{1,0:T(1,128)}', space=vmem, size = 0x200, scoped, tag = 'scratch operand']
  #allocation3 [shape = 'f32[1,128]{1,0:T(1,128)}', space=vmem, size = 0x200, scoped, tag = 'scratch operand']
  %s0 = inlined_call_operand.vmem [shape: bf16[512,128], index: 0, kind: input, shape index: {}]
  %s1 = inlined_call_operand.vmem [shape: bf16[128,128], index: 1, kind: input, shape index: {}]
  %s2 = inlined_call_operand.vmem [shape: f32[1,128], index: 2, kind: input, shape index: {}]
  %s3 = inlined_call_operand.vmem [shape: f32[1,128], index: 3, kind: input, shape index: {}]
  %s4 = inlined_call_operand.vmem [shape: f32[512,128], index: 4, kind: output, shape index: {0}]
  %s5 = inlined_call_operand.vmem [shape: f32[1,128], index: 5, kind: output, shape index: {1}]
  %s6 = inlined_call_operand.vmem [shape: f32[1,128], index: 6, kind: output, shape index: {2}]
  %7 = xla_tuple %s4, %s5, %s6
  %s8 = sld [smem:[#allocation0]]
  $region73: #{double_conv_forward.4} parent=0
    _
  %s10 = ssub.s32 1, %s8
  %s11 = scalar_select 0, %s10, %s8
  loop: start=0, step=1, limit=4
  $region2: #{double_conv_forward.4} parent=0 // loop_pre_header
    _
  $region3: #{double_conv_forward.4} parent=0 // loop_header
    %s13 = sphi 0, %s17
    %p14 = scmp.ge.s32.totalorder %s13, 4
    %s23 = sphi 0, %s25
    %s26 = sphi 0, %s23
    %s27 = sphi 0, %s26
    %s43 = sphi 0, %s27
    %s47 = sphi 0, %s47
    %s49 = sphi 0, %s47
    %s50 = sphi 0, %s49
    %s64 = sphi 0, %s50
    %s68 = sphi 0, %s68
    %s70 = sphi 0, %s68
    %s71 = sphi 0, %s70
    %s85 = sphi 0, %s71
    %s89 = sphi 0, %s89
    %s91 = sphi 0, %s89
    %s92 = sphi 0, %s91
    %s106 = sphi 0, %s92
    %s112 = sphi 0, %s114
    %s115 = sphi 0, %s112
    %s116 = sphi 0, %s115
    %s132 = sphi 0, %s116
    %s136 = sphi 0, %s136
    %s138 = sphi 0, %s136
    %s139 = sphi 0, %s138
    %s153 = sphi 0, %s139
    %s157 = sphi 0, %s157
    %s159 = sphi 0, %s157
    %s160 = sphi 0, %s159
    %s174 = sphi 0, %s160
  $region4: #{double_conv_forward.4} parent=0 // loop_header_branch
    %16 = sbr.rel (%p14) target = $region8
  $region5: #{double_conv_forward.4} parent=0 // loop_body
    %s18 = ssub.s32 %s13, 1
    %s19 = ssub.s32 %s13, 2
    %s20 = sadd.s32 %s13, 1
    %s21 = ssub.s32 %s13, %s20
    %p22 = scmp.eq.s32.totalorder %s21, 0
    %s24 = sadd.s32 %s23, 1
    %s25 = scalar_select %p22, %s23, %s24
    %p28 = pneg %p22
    %p29 = scmp.eq.s32.totalorder %s13, 1
    %p30 = por %p28, %p29
    %p31 = scmp.ne.s32.totalorder %s23, %s26
    %p32 = scmp.eq.s32.totalorder %s13, 0
    %p33 = por %p31, %p32
    %p34 = scmp.ne.s32.totalorder %s23, %s26
    %p35 = scmp.eq.s32.totalorder %s18, 1
    %p36 = por %p34, %p35
    %p37 = scmp.ne.s32.totalorder %s26, %s27
    %p38 = scmp.eq.s32.totalorder %s18, 0
    %p39 = por %p37, %p38
    %p40 = scmp.ne.s32.totalorder %s26, %s27
    %p41 = scmp.eq.s32.totalorder %s19, 1
    %p42 = por %p40, %p41
    %p44 = scmp.ne.s32.totalorder %s27, %s43
    %p45 = scmp.eq.s32.totalorder %s19, 0
    %p46 = por %p44, %p45
    %s48 = sadd.s32 %s47, 1
    %p51 = scmp.eq.s32.totalorder %s13, 1
    %p52 = scmp.ne.s32.totalorder %s47, %s49
    %p53 = scmp.eq.s32.totalorder %s13, 0
    %p54 = por %p52, %p53
    %p55 = scmp.ne.s32.totalorder %s47, %s49
    %p56 = scmp.eq.s32.totalorder %s18, 1
    %p57 = por %p55, %p56
    %p58 = scmp.ne.s32.totalorder %s49, %s50
    %p59 = scmp.eq.s32.totalorder %s18, 0
    %p60 = por %p58, %p59
    %p61 = scmp.ne.s32.totalorder %s49, %s50
    %p62 = scmp.eq.s32.totalorder %s19, 1
    %p63 = por %p61, %p62
    %p65 = scmp.ne.s32.totalorder %s50, %s64
    %p66 = scmp.eq.s32.totalorder %s19, 0
    %p67 = por %p65, %p66
    %s69 = sadd.s32 %s68, 1
    %p72 = scmp.eq.s32.totalorder %s13, 1
    %p73 = scmp.ne.s32.totalorder %s68, %s70
    %p74 = scmp.eq.s32.totalorder %s13, 0
    %p75 = por %p73, %p74
    %p76 = scmp.ne.s32.totalorder %s68, %s70
    %p77 = scmp.eq.s32.totalorder %s18, 1
    %p78 = por %p76, %p77
    %p79 = scmp.ne.s32.totalorder %s70, %s71
    %p80 = scmp.eq.s32.totalorder %s18, 0
    %p81 = por %p79, %p80
    %p82 = scmp.ne.s32.totalorder %s70, %s71
    %p83 = scmp.eq.s32.totalorder %s19, 1
    %p84 = por %p82, %p83
    %p86 = scmp.ne.s32.totalorder %s71, %s85
    %p87 = scmp.eq.s32.totalorder %s19, 0
    %p88 = por %p86, %p87
    %s90 = sadd.s32 %s89, 1
    %p93 = scmp.eq.s32.totalorder %s13, 1
    %p94 = scmp.ne.s32.totalorder %s89, %s91
    %p95 = scmp.eq.s32.totalorder %s13, 0
    %p96 = por %p94, %p95
    %p97 = scmp.ne.s32.totalorder %s89, %s91
    %p98 = scmp.eq.s32.totalorder %s18, 1
    %p99 = por %p97, %p98
    %p100 = scmp.ne.s32.totalorder %s91, %s92
    %p101 = scmp.eq.s32.totalorder %s18, 0
    %p102 = por %p100, %p101
    %p103 = scmp.ne.s32.totalorder %s91, %s92
    %p104 = scmp.eq.s32.totalorder %s19, 1
    %p105 = por %p103, %p104
    %p107 = scmp.ne.s32.totalorder %s92, %s106
    %p108 = scmp.eq.s32.totalorder %s19, 0
    %p109 = por %p107, %p108
    %s110 = ssub.s32 %s13, %s20
    %p111 = scmp.eq.s32.totalorder %s110, 0
    %s113 = sadd.s32 %s112, 1
    %s114 = scalar_select %p111, %s112, %s113
    %p117 = pneg %p111
    %p118 = scmp.eq.s32.totalorder %s13, 1
    %p119 = por %p117, %p118
    %p120 = scmp.ne.s32.totalorder %s112, %s115
    %p121 = scmp.eq.s32.totalorder %s13, 0
    %p122 = por %p120, %p121
    %p123 = scmp.ne.s32.totalorder %s112, %s115
    %p124 = scmp.eq.s32.totalorder %s18, 1
    %p125 = por %p123, %p124
    %p126 = scmp.ne.s32.totalorder %s115, %s116
    %p127 = scmp.eq.s32.totalorder %s18, 0
    %p128 = por %p126, %p127
    %p129 = scmp.ne.s32.totalorder %s115, %s116
    %p130 = scmp.eq.s32.totalorder %s19, 1
    %p131 = por %p129, %p130
    %p133 = scmp.ne.s32.totalorder %s116, %s132
    %p134 = scmp.eq.s32.totalorder %s19, 0
    %p135 = por %p133, %p134
    %s137 = sadd.s32 %s136, 1
    %p140 = scmp.eq.s32.totalorder %s13, 1
    %p141 = scmp.ne.s32.totalorder %s136, %s138
    %p142 = scmp.eq.s32.totalorder %s13, 0
    %p143 = por %p141, %p142
    %p144 = scmp.ne.s32.totalorder %s136, %s138
    %p145 = scmp.eq.s32.totalorder %s18, 1
    %p146 = por %p144, %p145
    %p147 = scmp.ne.s32.totalorder %s138, %s139
    %p148 = scmp.eq.s32.totalorder %s18, 0
    %p149 = por %p147, %p148
    %p150 = scmp.ne.s32.totalorder %s138, %s139
    %p151 = scmp.eq.s32.totalorder %s19, 1
    %p152 = por %p150, %p151
    %p154 = scmp.ne.s32.totalorder %s139, %s153
    %p155 = scmp.eq.s32.totalorder %s19, 0
    %p156 = por %p154, %p155
    %s158 = sadd.s32 %s157, 1
    %p161 = scmp.eq.s32.totalorder %s13, 1
    %p162 = scmp.ne.s32.totalorder %s157, %s159
    %p163 = scmp.eq.s32.totalorder %s13, 0
    %p164 = por %p162, %p163
    %p165 = scmp.ne.s32.totalorder %s157, %s159
    %p166 = scmp.eq.s32.totalorder %s18, 1
    %p167 = por %p165, %p166
    %p168 = scmp.ne.s32.totalorder %s159, %s160
    %p169 = scmp.eq.s32.totalorder %s18, 0
    %p170 = por %p168, %p169
    %p171 = scmp.ne.s32.totalorder %s159, %s160
    %p172 = scmp.eq.s32.totalorder %s19, 1
    %p173 = por %p171, %p172
    %p175 = scmp.ne.s32.totalorder %s160, %s174
    %p176 = scmp.eq.s32.totalorder %s19, 0
    %p177 = por %p175, %p176
    %p178 = scmp.le.s32.totalorder 1, %s13
    %p179 = scmp.lt.s32.totalorder %s13, 3
    %p180 = pnand %p178, %p179
    %p181 = pneg %p180
    // Predicated region
    $region9: #{double_conv_forward.4} parent=5 // pred_check
      _
    $region10: #{double_conv_forward.4} parent=5 // pred_check_branch
      %183 = sbr.rel (%p180) target = $region12
    $region11: #{double_conv_forward.4} parent=5 // pred_region
      %s184 = ssub.s32 %s13, 1
      // Predicated region
      $region13: #{double_conv_forward.4} parent=11 // pred_check
        %p185 = pneg %p60
      $region14: #{double_conv_forward.4} parent=11 // pred_check_branch
        %187 = sbr.rel (%p185) target = $region16
      $region15: #{double_conv_forward.4} parent=11 // pred_region
        _
      $region16: #{double_conv_forward.4} parent=11 // pred_fallthru
        _
      // Predicated region
      $region17: #{double_conv_forward.4} parent=11 // pred_check
        %p188 = pneg %p81
      $region18: #{double_conv_forward.4} parent=11 // pred_check_branch
        %190 = sbr.rel (%p188) target = $region20
      $region19: #{double_conv_forward.4} parent=11 // pred_region
        _
      $region20: #{double_conv_forward.4} parent=11 // pred_fallthru
        _
      // Predicated region
      $region21: #{double_conv_forward.4} parent=11 // pred_check
        %p191 = pneg %p102
      $region22: #{double_conv_forward.4} parent=11 // pred_check_branch
        %193 = sbr.rel (%p191) target = $region24
      $region23: #{double_conv_forward.4} parent=11 // pred_region
        _
      $region24: #{double_conv_forward.4} parent=11 // pred_fallthru
        _
    $region12: #{double_conv_forward.4} parent=5 // pred_fallthru
      _
    %p194 = scmp.lt.s32.totalorder %s13, 2
    // Predicated region
    $region25: #{double_conv_forward.4} parent=5 // pred_check
      %p195 = pneg %p194
    $region26: #{double_conv_forward.4} parent=5 // pred_check_branch
      %197 = sbr.rel (%p195) target = $region28
    $region27: #{double_conv_forward.4} parent=5 // pred_region
      // Predicated region
      $region29: #{double_conv_forward.4} parent=27 // pred_check
        %p198 = pneg %p33
      $region30: #{double_conv_forward.4} parent=27 // pred_check_branch
        %200 = sbr.rel (%p198) target = $region32
      $region31: #{double_conv_forward.4} parent=27 // pred_region
        %s201 = smul.u32 32, %s13
        %p202 = scmp.lt.s32.totalorder %s201, 63
        %s203 = scalar_select %p202, %s201, 63
        %s204 = smul.addr %s203, 4
        %s205 = scalar_lea.vmem %s0, %s204
        %s206 = smul.u32 32, %s13
      $region32: #{double_conv_forward.4} parent=27 // pred_fallthru
        _
    $region28: #{double_conv_forward.4} parent=5 // pred_fallthru
      _
    %p207 = scmp.le.s32.totalorder 1, %s13
    %p208 = scmp.lt.s32.totalorder %s13, 3
    %p209 = pnand %p207, %p208
    %p210 = pneg %p209
    // Predicated region
    $region33: #{double_conv_forward.4} parent=5 // pred_check
      _
    $region34: #{double_conv_forward.4} parent=5 // pred_check_branch
      %212 = sbr.rel (%p209) target = $region36
    $region35: #{double_conv_forward.4} parent=5 // pred_region
      %s213 = ssub.s32 %s13, 1
      %s214 = smul.u32 32, %s18
      %p215 = scmp.lt.s32.totalorder %s214, 63
      %s216 = scalar_select %p215, %s214, 63
      %s217 = smul.addr %s216, 4
      %s218 = scalar_lea.vmem %s0, %s217
      %p219 = pneg %p39
      %p220 = pneg %p36
      %p221 = pneg %p60
      %p222 = pneg %p57
      %p223 = pneg %p81
      %p224 = pneg %p78
      %p225 = pneg %p102
      %p226 = pneg %p99
      %p227 = pneg %p128
      %p228 = pneg %p125
      %s229 = smul.u32 32, %s18
      %p230 = scmp.lt.s32.totalorder %s229, 63
      %s231 = scalar_select %p230, %s229, 63
      %s232 = smul.addr %s231, 8
      %s233 = scalar_lea.vmem %s4, %s232
      %p234 = pneg %p149
      %p235 = pneg %p146
      %p236 = pneg %p170
      %p237 = pneg %p167
      %s238 = smul.u32 32, %s18
      %p239 = scmp.lt.s32.totalorder %s238, 63
      %s240 = scalar_select %p239, %s238, 63
      %s241 = smul.addr %s240, 4
      %s242 = scalar_lea.vmem %s0, %s241
      %s243 = smul.u32 32, %s18
      %s244 = smul.u32 32, %s18
      %p245 = scmp.lt.s32.totalorder %s244, 63
      %s246 = scalar_select %p245, %s244, 63
      %s247 = smul.addr %s246, 8
      %s248 = scalar_lea.vmem %s4, %s247
      %s249 = smul.u32 32, %s18
      %p251 = scmp.eq.s32.totalorder %s18, 0
      // Predicated region
      $region37: #{double_conv_forward.4} parent=35 // pred_check
        %p252 = pneg %p251
      $region38: #{double_conv_forward.4} parent=35 // pred_check_branch
        %254 = sbr.rel (%p252) target = $region40
      $region39: #{double_conv_forward.4} parent=35 // pred_region
        %255 = vst [vmem:[#allocation2] sm:$0x1] 0.0
        %256 = vst [vmem:[#allocation3] sm:$0x1] 0.0
      $region40: #{double_conv_forward.4} parent=35 // pred_fallthru
        _
      %v257 = vld [vmem:[%s242] sm:$0xf]
      %v258 = vld [vmem:[%s242 + $0x4] sm:$0xf]
      %v259 = vld [vmem:[%s242 + $0x8] sm:$0xf]
      %v260 = vld [vmem:[%s242 + $0xc] sm:$0xf]
      %v261 = vld [vmem:[%s242 + $0x10] sm:$0xf]
      %v262 = vld [vmem:[%s242 + $0x14] sm:$0xf]
      %v263 = vld [vmem:[%s242 + $0x18] sm:$0xf]
      %v264 = vld [vmem:[%s242 + $0x1c] sm:$0xf]
      %v265 = vld [vmem:[%s242 + $0x20] sm:$0xf]
      %v266 = vld [vmem:[%s242 + $0x24] sm:$0xf]
      %v267 = vld [vmem:[%s242 + $0x28] sm:$0xf]
      %v268 = vld [vmem:[%s242 + $0x2c] sm:$0xf]
      %v269 = vld [vmem:[%s242 + $0x30] sm:$0xf]
      %v270 = vld [vmem:[%s242 + $0x34] sm:$0xf]
      %v271 = vld [vmem:[%s242 + $0x38] sm:$0xf]
      %v272 = vld [vmem:[%s242 + $0x3c] sm:$0xf]
      %v273 = vld [vmem:[%s242 + $0x40] sm:$0xf]
      %v274 = vld [vmem:[%s242 + $0x44] sm:$0xf]
      %v275 = vld [vmem:[%s242 + $0x48] sm:$0xf]
      %v276 = vld [vmem:[%s242 + $0x4c] sm:$0xf]
      %v277 = vld [vmem:[%s242 + $0x50] sm:$0xf]
      %v278 = vld [vmem:[%s242 + $0x54] sm:$0xf]
      %v279 = vld [vmem:[%s242 + $0x58] sm:$0xf]
      %v280 = vld [vmem:[%s242 + $0x5c] sm:$0xf]
      %v281 = vld [vmem:[%s242 + $0x60] sm:$0xf]
      %v282 = vld [vmem:[%s242 + $0x64] sm:$0xf]
      %v283 = vld [vmem:[%s242 + $0x68] sm:$0xf]
      %v284 = vld [vmem:[%s242 + $0x6c] sm:$0xf]
      %v285 = vld [vmem:[%s242 + $0x70] sm:$0xf]
      %v286 = vld [vmem:[%s242 + $0x74] sm:$0xf]
      %v287 = vld [vmem:[%s242 + $0x78] sm:$0xf]
      %v288 = vld [vmem:[%s242 + $0x7c] sm:$0xf]
      %v289 = vld [vmem:[%s1] sm:$0xf]
      %v290 = vld [vmem:[%s1 + $0x4] sm:$0xf]
      %v291 = vld [vmem:[%s1 + $0x8] sm:$0xf]
      %v292 = vld [vmem:[%s1 + $0xc] sm:$0xf]
      %v293 = vld [vmem:[%s1 + $0x10] sm:$0xf]
      %v294 = vld [vmem:[%s1 + $0x14] sm:$0xf]
      %v295 = vld [vmem:[%s1 + $0x18] sm:$0xf]
      %v296 = vld [vmem:[%s1 + $0x1c] sm:$0xf]
      %v297 = vld [vmem:[%s1 + $0x20] sm:$0xf]
      %v298 = vld [vmem:[%s1 + $0x24] sm:$0xf]
      %v299 = vld [vmem:[%s1 + $0x28] sm:$0xf]
      %v300 = vld [vmem:[%s1 + $0x2c] sm:$0xf]
      %v301 = vld [vmem:[%s1 + $0x30] sm:$0xf]
      %v302 = vld [vmem:[%s1 + $0x34] sm:$0xf]
      %v303 = vld [vmem:[%s1 + $0x38] sm:$0xf]
      %v304 = vld [vmem:[%s1 + $0x3c] sm:$0xf]
      %v337 = vunpack.c.l.b16 %v257
      %v338 = vunpack.c.l.b16 %v258
      %v339 = vunpack.c.l.b16 %v259
      %v340 = vunpack.c.l.b16 %v260
      %v341 = vunpack.c.l.b16 %v261
      %v342 = vunpack.c.l.b16 %v262
      %v343 = vunpack.c.l.b16 %v263
      %v344 = vunpack.c.l.b16 %v264
      %v345 = vunpack.c.l.b16 %v265
      %v346 = vunpack.c.l.b16 %v266
      %v347 = vunpack.c.l.b16 %v267
      %v348 = vunpack.c.l.b16 %v268
      %v349 = vunpack.c.l.b16 %v269
      %v350 = vunpack.c.l.b16 %v270
      %v351 = vunpack.c.l.b16 %v271
      %v352 = vunpack.c.l.b16 %v272
      %v353 = vunpack.c.l.b16 %v273
      %v354 = vunpack.c.l.b16 %v274
      %v355 = vunpack.c.l.b16 %v275
      %v356 = vunpack.c.l.b16 %v276
      %v357 = vunpack.c.l.b16 %v277
      %v358 = vunpack.c.l.b16 %v278
      %v359 = vunpack.c.l.b16 %v279
      %v360 = vunpack.c.l.b16 %v280
      %v361 = vunpack.c.l.b16 %v281
      %v362 = vunpack.c.l.b16 %v282
      %v363 = vunpack.c.l.b16 %v283
      %v364 = vunpack.c.l.b16 %v284
      %v365 = vunpack.c.l.b16 %v285
      %v366 = vunpack.c.l.b16 %v286
      %v367 = vunpack.c.l.b16 %v287
      %v368 = vunpack.c.l.b16 %v288
      %v369 = vpack.c.b16 %v338, %v337
      %v370 = vpack.c.b16 %v340, %v339
      %v371 = vpack.c.b16 %v342, %v341
      %v372 = vpack.c.b16 %v344, %v343
      %v373 = vpack.c.b16 %v346, %v345
      %v374 = vpack.c.b16 %v348, %v347
      %v375 = vpack.c.b16 %v350, %v349
      %v376 = vpack.c.b16 %v352, %v351
      %v377 = vpack.c.b16 %v354, %v353
      %v378 = vpack.c.b16 %v356, %v355
      %v379 = vpack.c.b16 %v358, %v357
      %v380 = vpack.c.b16 %v360, %v359
      %v381 = vpack.c.b16 %v362, %v361
      %v382 = vpack.c.b16 %v364, %v363
      %v383 = vpack.c.b16 %v366, %v365
      %v384 = vpack.c.b16 %v368, %v367
      %v417 = vunpack.c.l.b16 %v289
      %v418 = vunpack.c.l.b16 %v290
      %v419 = vunpack.c.l.b16 %v291
      %v420 = vunpack.c.l.b16 %v292
      %v421 = vunpack.c.l.b16 %v293
      %v422 = vunpack.c.l.b16 %v294
      %v423 = vunpack.c.l.b16 %v295
      %v424 = vunpack.c.l.b16 %v296
      %v425 = vunpack.c.l.b16 %v297
      %v426 = vunpack.c.l.b16 %v298
      %v427 = vunpack.c.l.b16 %v299
      %v428 = vunpack.c.l.b16 %v300
      %v429 = vunpack.c.l.b16 %v301
      %v430 = vunpack.c.l.b16 %v302
      %v431 = vunpack.c.l.b16 %v303
      %v432 = vunpack.c.l.b16 %v304
      %v433 = vpack.c.b16 %v418, %v417
      %v434 = vpack.c.b16 %v420, %v419
      %v435 = vpack.c.b16 %v422, %v421
      %v436 = vpack.c.b16 %v424, %v423
      %v437 = vpack.c.b16 %v426, %v425
      %v438 = vpack.c.b16 %v428, %v427
      %v439 = vpack.c.b16 %v430, %v429
      %v440 = vpack.c.b16 %v432, %v431
      %449 = vmatprep.subr.bf16.mxu0 0
      %450 = vmatpush1.bf16.msra.mxu0 %v433
      %451 = vmatprep.subr.bf16.mxu0 0
      %452 = vmatpush1.bf16.msra.mxu0 %v434
      %453 = vmatprep.subr.bf16.mxu0 0
      %454 = vmatpush1.bf16.msra.mxu0 %v435
      %455 = vmatprep.subr.bf16.mxu0 0
      %456 = vmatpush1.bf16.msra.mxu0 %v436
      %457 = vmatprep.subr.bf16.mxu0 0
      %458 = vmatpush1.bf16.msra.mxu0 %v437
      %459 = vmatprep.subr.bf16.mxu0 0
      %460 = vmatpush1.bf16.msra.mxu0 %v438
      %461 = vmatprep.subr.bf16.mxu0 0
      %462 = vmatpush1.bf16.msra.mxu0 %v439
      %463 = vmatprep.subr.bf16.mxu0 0
      %464 = vmatpush1.bf16.msra.mxu0 %v440
      %465 = vmatprep.subr.bf16.mxu0 0
      %466 = vmatpush1.bf16.msra.mxu0 0
      %467 = vmatprep.subr.bf16.mxu0 0
      %468 = vmatpush1.bf16.msra.mxu0 0
      %469 = vmatprep.subr.bf16.mxu0 0
      %470 = vmatpush1.bf16.msra.mxu0 0
      %471 = vmatprep.subr.bf16.mxu0 0
      %472 = vmatpush1.bf16.msra.mxu0 0
      %473 = vmatprep.subr.bf16.mxu0 0
      %474 = vmatpush1.bf16.msra.mxu0 0
      %475 = vmatprep.subr.bf16.mxu0 0
      %476 = vmatpush1.bf16.msra.mxu0 0
      %477 = vmatprep.subr.bf16.mxu0 0
      %478 = vmatpush1.bf16.msra.mxu0 0
      %479 = vmatprep.subr.bf16.mxu0 0
      %480 = vmatpush1.bf16.msra.mxu0 0
      %481 = vmatprep.mubr.bf16.mxu0 0
      %482 = vmatmul.mubr.bf16.gmra.mrb[0].mxu0 %v369
      %v483 = vpop.f32.mrb[0].mxu0
      %v484 = vadd.f32 0.0, %v483
      %v485 = vpop.f32.mrb[0].mxu0
      %v486 = vpop.f32.mrb[0].mxu0
      %v487 = vadd.f32 0.0, %v486
      %v488 = vpop.f32.mrb[0].mxu0
      %489 = vmatprep.mubr.bf16.mxu0 0
      %490 = vmatmul.mubr.bf16.gmra.mrb[0].mxu0 %v370
      %v491 = vpop.f32.mrb[0].mxu0
      %v492 = vadd.f32 0.0, %v491
      %v493 = vpop.f32.mrb[0].mxu0
      %v494 = vpop.f32.mrb[0].mxu0
      %v495 = vadd.f32 0.0, %v494
      %v496 = vpop.f32.mrb[0].mxu0
      %497 = vmatprep.mubr.bf16.mxu0 0
      %498 = vmatmul.mubr.bf16.gmra.mrb[0].mxu0 %v371
      %v499 = vpop.f32.mrb[0].mxu0
      %v500 = vadd.f32 0.0, %v499
      %v501 = vpop.f32.mrb[0].mxu0
      %v502 = vpop.f32.mrb[0].mxu0
      %v503 = vadd.f32 0.0, %v502
      %v504 = vpop.f32.mrb[0].mxu0
      %505 = vmatprep.mubr.bf16.mxu0 0
      %506 = vmatmul.mubr.bf16.gmra.mrb[0].mxu0 %v372
      %v507 = vpop.f32.mrb[0].mxu0
      %v508 = vadd.f32 0.0, %v507
      %v509 = vpop.f32.mrb[0].mxu0
      %v510 = vpop.f32.mrb[0].mxu0
      %v511 = vadd.f32 0.0, %v510
      %v512 = vpop.f32.mrb[0].mxu0
      %513 = vmatprep.mubr.bf16.mxu0 0
      %514 = vmatmul.mubr.bf16.gmra.mrb[0].mxu0 %v373
      %v515 = vpop.f32.mrb[0].mxu0
      %v516 = vadd.f32 0.0, %v515
      %v517 = vpop.f32.mrb[0].mxu0
      %v518 = vpop.f32.mrb[0].mxu0
      %v519 = vadd.f32 0.0, %v518
      %v520 = vpop.f32.mrb[0].mxu0
      %521 = vmatprep.mubr.bf16.mxu0 0
      %522 = vmatmul.mubr.bf16.gmra.mrb[0].mxu0 %v374
      %v523 = vpop.f32.mrb[0].mxu0
      %v524 = vadd.f32 0.0, %v523
      %v525 = vpop.f32.mrb[0].mxu0
      %v526 = vpop.f32.mrb[0].mxu0
      %v527 = vadd.f32 0.0, %v526
      %v528 = vpop.f32.mrb[0].mxu0
      %529 = vmatprep.mubr.bf16.mxu0 0
      %530 = vmatmul.mubr.bf16.gmra.mrb[0].mxu0 %v375
      %v531 = vpop.f32.mrb[0].mxu0
      %v532 = vadd.f32 0.0, %v531
      %v533 = vpop.f32.mrb[0].mxu0
      %v534 = vpop.f32.mrb[0].mxu0
      %v535 = vadd.f32 0.0, %v534
      %v536 = vpop.f32.mrb[0].mxu0
      %537 = vmatprep.mubr.bf16.mxu0 0
      %538 = vmatmul.mubr.bf16.gmra.mrb[0].mxu0 %v376
      %v539 = vpop.f32.mrb[0].mxu0
      %v540 = vadd.f32 0.0, %v539
      %v541 = vpop.f32.mrb[0].mxu0
      %v542 = vpop.f32.mrb[0].mxu0
      %v543 = vadd.f32 0.0, %v542
      %v544 = vpop.f32.mrb[0].mxu0
      %545 = vmatprep.mubr.bf16.mxu0 0
      %546 = vmatmul.mubr.bf16.gmra.mrb[0].mxu0 %v377
      %v547 = vpop.f32.mrb[0].mxu0
      %v548 = vadd.f32 0.0, %v547
      %v549 = vpop.f32.mrb[0].mxu0
      %v550 = vpop.f32.mrb[0].mxu0
      %v551 = vadd.f32 0.0, %v550
      %v552 = vpop.f32.mrb[0].mxu0
      %553 = vmatprep.mubr.bf16.mxu0 0
      %554 = vmatmul.mubr.bf16.gmra.mrb[0].mxu0 %v378
      %v555 = vpop.f32.mrb[0].mxu0
      %v556 = vadd.f32 0.0, %v555
      %v557 = vpop.f32.mrb[0].mxu0
      %v558 = vpop.f32.mrb[0].mxu0
      %v559 = vadd.f32 0.0, %v558
      %v560 = vpop.f32.mrb[0].mxu0
      %561 = vmatprep.mubr.bf16.mxu0 0
      %562 = vmatmul.mubr.bf16.gmra.mrb[0].mxu0 %v379
      %v563 = vpop.f32.mrb[0].mxu0
      %v564 = vadd.f32 0.0, %v563
      %v565 = vpop.f32.mrb[0].mxu0
      %v566 = vpop.f32.mrb[0].mxu0
      %v567 = vadd.f32 0.0, %v566
      %v568 = vpop.f32.mrb[0].mxu0
      %569 = vmatprep.mubr.bf16.mxu0 0
      %570 = vmatmul.mubr.bf16.gmra.mrb[0].mxu0 %v380
      %v571 = vpop.f32.mrb[0].mxu0
      %v572 = vadd.f32 0.0, %v571
      %v573 = vpop.f32.mrb[0].mxu0
      %v574 = vpop.f32.mrb[0].mxu0
      %v575 = vadd.f32 0.0, %v574
      %v576 = vpop.f32.mrb[0].mxu0
      %577 = vmatprep.mubr.bf16.mxu0 0
      %578 = vmatmul.mubr.bf16.gmra.mrb[0].mxu0 %v381
      %v579 = vpop.f32.mrb[0].mxu0
      %v580 = vadd.f32 0.0, %v579
      %v581 = vpop.f32.mrb[0].mxu0
      %v582 = vpop.f32.mrb[0].mxu0
      %v583 = vadd.f32 0.0, %v582
      %v584 = vpop.f32.mrb[0].mxu0
      %585 = vmatprep.mubr.bf16.mxu0 0
      %586 = vmatmul.mubr.bf16.gmra.mrb[0].mxu0 %v382
      %v587 = vpop.f32.mrb[0].mxu0
      %v588 = vadd.f32 0.0, %v587
      %v589 = vpop.f32.mrb[0].mxu0
      %v590 = vpop.f32.mrb[0].mxu0
      %v591 = vadd.f32 0.0, %v590
      %v592 = vpop.f32.mrb[0].mxu0
      %593 = vmatprep.mubr.bf16.mxu0 0
      %594 = vmatmul.mubr.bf16.gmra.mrb[0].mxu0 %v383
      %v595 = vpop.f32.mrb[0].mxu0
      %v596 = vadd.f32 0.0, %v595
      %v597 = vpop.f32.mrb[0].mxu0
      %v598 = vpop.f32.mrb[0].mxu0
      %v599 = vadd.f32 0.0, %v598
      %v600 = vpop.f32.mrb[0].mxu0
      %601 = vmatprep.mubr.bf16.mxu0 0
      %602 = vmatmul.mubr.bf16.gmra.mrb[0].mxu0 %v384
      %v603 = vpop.f32.mrb[0].mxu0
      %v604 = vadd.f32 0.0, %v603
      %v605 = vpop.f32.mrb[0].mxu0
      %v606 = vpop.f32.mrb[0].mxu0
      %v607 = vadd.f32 0.0, %v606
      %v608 = vpop.f32.mrb[0].mxu0
      %609 = vdwg.mxu0
      %610 = vst [vmem:[%s248] sm:$0xff] %v484
      %611 = vst [vmem:[%s248 + $0x8] sm:$0xff] %v487
      %612 = vst [vmem:[%s248 + $0x10] sm:$0xff] %v492
      %613 = vst [vmem:[%s248 + $0x18] sm:$0xff] %v495
      %614 = vst [vmem:[%s248 + $0x20] sm:$0xff] %v500
      %615 = vst [vmem:[%s248 + $0x28] sm:$0xff] %v503
      %616 = vst [vmem:[%s248 + $0x30] sm:$0xff] %v508
      %617 = vst [vmem:[%s248 + $0x38] sm:$0xff] %v511
      %618 = vst [vmem:[%s248 + $0x40] sm:$0xff] %v516
      %619 = vst [vmem:[%s248 + $0x48] sm:$0xff] %v519
      %620 = vst [vmem:[%s248 + $0x50] sm:$0xff] %v524
      %621 = vst [vmem:[%s248 + $0x58] sm:$0xff] %v527
      %622 = vst [vmem:[%s248 + $0x60] sm:$0xff] %v532
      %623 = vst [vmem:[%s248 + $0x68] sm:$0xff] %v535
      %624 = vst [vmem:[%s248 + $0x70] sm:$0xff] %v540
      %625 = vst [vmem:[%s248 + $0x78] sm:$0xff] %v543
      %626 = vst [vmem:[%s248 + $0x80] sm:$0xff] %v548
      %627 = vst [vmem:[%s248 + $0x88] sm:$0xff] %v551
      %628 = vst [vmem:[%s248 + $0x90] sm:$0xff] %v556
      %629 = vst [vmem:[%s248 + $0x98] sm:$0xff] %v559
      %630 = vst [vmem:[%s248 + $0xa0] sm:$0xff] %v564
      %631 = vst [vmem:[%s248 + $0xa8] sm:$0xff] %v567
      %632 = vst [vmem:[%s248 + $0xb0] sm:$0xff] %v572
      %633 = vst [vmem:[%s248 + $0xb8] sm:$0xff] %v575
      %634 = vst [vmem:[%s248 + $0xc0] sm:$0xff] %v580
      %635 = vst [vmem:[%s248 + $0xc8] sm:$0xff] %v583
      %636 = vst [vmem:[%s248 + $0xd0] sm:$0xff] %v588
      %637 = vst [vmem:[%s248 + $0xd8] sm:$0xff] %v591
      %638 = vst [vmem:[%s248 + $0xe0] sm:$0xff] %v596
      %639 = vst [vmem:[%s248 + $0xe8] sm:$0xff] %v599
      %640 = vst [vmem:[%s248 + $0xf0] sm:$0xff] %v604
      %641 = vst [vmem:[%s248 + $0xf8] sm:$0xff] %v607
      %v642 = vld [vmem:[#allocation2] sm:$0x1]
      %v643 = vadd.f32 %v484, %v487
      %v644 = vadd.f32 %v643, %v492
      %v645 = vadd.f32 %v644, %v495
      %v646 = vadd.f32 %v645, %v500
      %v647 = vadd.f32 %v646, %v503
      %v648 = vadd.f32 %v647, %v508
      %v649 = vadd.f32 %v648, %v511
      %v650 = vadd.f32 %v649, %v516
      %v651 = vadd.f32 %v650, %v519
      %v652 = vadd.f32 %v651, %v524
      %v653 = vadd.f32 %v652, %v527
      %v654 = vadd.f32 %v653, %v532
      %v655 = vadd.f32 %v654, %v535
      %v656 = vadd.f32 %v655, %v540
      %v657 = vadd.f32 %v656, %v543
      %v658 = vadd.f32 %v657, %v548
      %v659 = vadd.f32 %v658, %v551
      %v660 = vadd.f32 %v659, %v556
      %v661 = vadd.f32 %v660, %v559
      %v662 = vadd.f32 %v661, %v564
      %v663 = vadd.f32 %v662, %v567
      %v664 = vadd.f32 %v663, %v572
      %v665 = vadd.f32 %v664, %v575
      %v666 = vadd.f32 %v665, %v580
      %v667 = vadd.f32 %v666, %v583
      %v668 = vadd.f32 %v667, %v588
      %v669 = vadd.f32 %v668, %v591
      %v670 = vadd.f32 %v669, %v596
      %v671 = vadd.f32 %v670, %v599
      %v672 = vadd.f32 %v671, %v604
      %v673 = vadd.f32 %v672, %v607
      %v674 = vrot.slane %v673, 4
      %v675 = vadd.f32 %v673, %v674
      %v676 = vrot.slane %v675, 2
      %v677 = vadd.f32 %v675, %v676
      %v678 = vrot.slane %v677, 1
      %v679 = vadd.f32 %v677, %v678
      %v680 = vadd.f32 %v642, %v679
      %681 = vst [vmem:[#allocation2] sm:$0x1] %v680
      %v682 = vld [vmem:[#allocation3] sm:$0x1]
      %v683 = vmul.f32 %v484, %v484
      %v684 = vmul.f32 %v487, %v487
      %v685 = vmul.f32 %v492, %v492
      %v686 = vmul.f32 %v495, %v495
      %v687 = vmul.f32 %v500, %v500
      %v688 = vmul.f32 %v503, %v503
      %v689 = vmul.f32 %v508, %v508
      %v690 = vmul.f32 %v511, %v511
      %v691 = vmul.f32 %v516, %v516
      %v692 = vmul.f32 %v519, %v519
      %v693 = vmul.f32 %v524, %v524
      %v694 = vmul.f32 %v527, %v527
      %v695 = vmul.f32 %v532, %v532
      %v696 = vmul.f32 %v535, %v535
      %v697 = vmul.f32 %v540, %v540
      %v698 = vmul.f32 %v543, %v543
      %v699 = vmul.f32 %v548, %v548
      %v700 = vmul.f32 %v551, %v551
      %v701 = vmul.f32 %v556, %v556
      %v702 = vmul.f32 %v559, %v559
      %v703 = vmul.f32 %v564, %v564
      %v704 = vmul.f32 %v567, %v567
      %v705 = vmul.f32 %v572, %v572
      %v706 = vmul.f32 %v575, %v575
      %v707 = vmul.f32 %v580, %v580
      %v708 = vmul.f32 %v583, %v583
      %v709 = vmul.f32 %v588, %v588
      %v710 = vmul.f32 %v591, %v591
      %v711 = vmul.f32 %v596, %v596
      %v712 = vmul.f32 %v599, %v599
      %v713 = vmul.f32 %v604, %v604
      %v714 = vmul.f32 %v607, %v607
      %v715 = vadd.f32 %v683, %v684
      %v716 = vadd.f32 %v715, %v685
      %v717 = vadd.f32 %v716, %v686
      %v718 = vadd.f32 %v717, %v687
      %v719 = vadd.f32 %v718, %v688
      %v720 = vadd.f32 %v719, %v689
      %v721 = vadd.f32 %v720, %v690
      %v722 = vadd.f32 %v721, %v691
      %v723 = vadd.f32 %v722, %v692
      %v724 = vadd.f32 %v723, %v693
      %v725 = vadd.f32 %v724, %v694
      %v726 = vadd.f32 %v725, %v695
      %v727 = vadd.f32 %v726, %v696
      %v728 = vadd.f32 %v727, %v697
      %v729 = vadd.f32 %v728, %v698
      %v730 = vadd.f32 %v729, %v699
      %v731 = vadd.f32 %v730, %v700
      %v732 = vadd.f32 %v731, %v701
      %v733 = vadd.f32 %v732, %v702
      %v734 = vadd.f32 %v733, %v703
      %v735 = vadd.f32 %v734, %v704
      %v736 = vadd.f32 %v735, %v705
      %v737 = vadd.f32 %v736, %v706
      %v738 = vadd.f32 %v737, %v707
      %v739 = vadd.f32 %v738, %v708
      %v740 = vadd.f32 %v739, %v709
      %v741 = vadd.f32 %v740, %v710
      %v742 = vadd.f32 %v741, %v711
      %v743 = vadd.f32 %v742, %v712
      %v744 = vadd.f32 %v743, %v713
      %v745 = vadd.f32 %v744, %v714
      %v746 = vrot.slane %v745, 4
      %v747 = vadd.f32 %v745, %v746
      %v748 = vrot.slane %v747, 2
      %v749 = vadd.f32 %v747, %v748
      %v750 = vrot.slane %v749, 1
      %v751 = vadd.f32 %v749, %v750
      %v752 = vadd.f32 %v682, %v751
      %753 = vst [vmem:[#allocation3] sm:$0x1] %v752
      %p754 = scmp.eq.s32.totalorder %s18, 1
      // Predicated region
      $region41: #{double_conv_forward.4} parent=35 // pred_check
        %p755 = pneg %p754
      $region42: #{double_conv_forward.4} parent=35 // pred_check_branch
        %757 = sbr.rel (%p755) target = $region44
      $region43: #{double_conv_forward.4} parent=35 // pred_region
        %v758 = vld [vmem:[#allocation2] sm:$0x1]
        %v759 = vmul.f32 %v758, 0.001953125
        %v760 = vld [vmem:[#allocation3] sm:$0x1]
        %v761 = vmul.f32 %v760, 0.001953125
        %v762 = vmul.f32 %v759, %v759
        %v763 = vsub.f32 %v761, %v762
        %v764 = vmax.f32 %v763, 0.0
        %v765 = vadd.f32 %v764, 1e-05
        %v766 = vrsqrt.pop %v765
        %v767 = vld [vmem:[%s2] sm:$0x1]
        %v768 = vmul.f32 %v767, %v766
        %769 = vst [vmem:[%s5] sm:$0x1] %v768
        %v770 = vld [vmem:[%s3] sm:$0x1]
        %v771 = vmul.f32 %v759, %v768
        %v772 = vsub.f32 %v770, %v771
        %773 = vst [vmem:[%s6] sm:$0x1] %v772
      $region44: #{double_conv_forward.4} parent=35 // pred_fallthru
        _
      %s774 = smul.u32 32, %s18
      %p775 = scmp.lt.s32.totalorder %s774, 63
      %s776 = scalar_select %p775, %s774, 63
      %s777 = smul.addr %s776, 8
      %s778 = scalar_lea.vmem %s4, %s777
      // Predicated region
      $region45: #{double_conv_forward.4} parent=35 // pred_check
        %p779 = pneg %p125
      $region46: #{double_conv_forward.4} parent=35 // pred_check_branch
        %781 = sbr.rel (%p779) target = $region48
      $region47: #{double_conv_forward.4} parent=35 // pred_region
        %s782 = smul.u32 32, %s18
      $region48: #{double_conv_forward.4} parent=35 // pred_fallthru
        _
      // Predicated region
      $region49: #{double_conv_forward.4} parent=35 // pred_check
        %p783 = pneg %p146
      $region50: #{double_conv_forward.4} parent=35 // pred_check_branch
        %785 = sbr.rel (%p783) target = $region52
      $region51: #{double_conv_forward.4} parent=35 // pred_region
        _
      $region52: #{double_conv_forward.4} parent=35 // pred_fallthru
        _
      // Predicated region
      $region53: #{double_conv_forward.4} parent=35 // pred_check
        %p786 = pneg %p167
      $region54: #{double_conv_forward.4} parent=35 // pred_check_branch
        %788 = sbr.rel (%p786) target = $region56
      $region55: #{double_conv_forward.4} parent=35 // pred_region
        _
      $region56: #{double_conv_forward.4} parent=35 // pred_fallthru
        _
      // Predicated region
      $region57: #{double_conv_forward.4} parent=35 // pred_check
        %p789 = pneg %p146
      $region58: #{double_conv_forward.4} parent=35 // pred_check_branch
        %791 = sbr.rel (%p789) target = $region60
      $region59: #{double_conv_forward.4} parent=35 // pred_region
        _
      $region60: #{double_conv_forward.4} parent=35 // pred_fallthru
        _
      // Predicated region
      $region61: #{double_conv_forward.4} parent=35 // pred_check
        %p792 = pneg %p167
      $region62: #{double_conv_forward.4} parent=35 // pred_check_branch
        %794 = sbr.rel (%p792) target = $region64
      $region63: #{double_conv_forward.4} parent=35 // pred_region
        _
      $region64: #{double_conv_forward.4} parent=35 // pred_fallthru
        _
    $region36: #{double_conv_forward.4} parent=5 // pred_fallthru
      _
    %p795 = scmp.le.s32.totalorder 2, %s13
    // Predicated region
    $region65: #{double_conv_forward.4} parent=5 // pred_check
      %p796 = pneg %p795
    $region66: #{double_conv_forward.4} parent=5 // pred_check_branch
      %798 = sbr.rel (%p796) target = $region68
    $region67: #{double_conv_forward.4} parent=5 // pred_region
      %s799 = ssub.s32 %s13, 2
      // Predicated region
      $region69: #{double_conv_forward.4} parent=67 // pred_check
        %p800 = pneg %p131
      $region70: #{double_conv_forward.4} parent=67 // pred_check_branch
        %802 = sbr.rel (%p800) target = $region72
      $region71: #{double_conv_forward.4} parent=67 // pred_region
        %s803 = smul.u32 32, %s19
        %p804 = scmp.lt.s32.totalorder %s803, 63
        %s805 = scalar_select %p804, %s803, 63
        %s806 = smul.addr %s805, 8
        %s807 = scalar_lea.vmem %s4, %s806
      $region72: #{double_conv_forward.4} parent=67 // pred_fallthru
        _
    $region68: #{double_conv_forward.4} parent=5 // pred_fallthru
      _
  $region6: #{double_conv_forward.4} parent=0 // loop_footer
    %s17 = sadd.s32 1, %s13
  $region7: #{double_conv_forward.4} parent=0 // loop_footer_branch
    %12 = sbr.rel target = $region3
  $region8: #{double_conv_forward.4} parent=0 // loop_exit
    _

// kernel: double_conv_forward.5
$region0: #{double_conv_forward.5}
  #allocation0 [shape = 'u32[]', space=smem, size = 0x4, offset = 0x4, fixed_abs, tag = 'smem constant byte address 0x4 - core index']
  #allocation1 [shape = 'u32[144,128]{1,0:T(1,128)}', space=vmem, size = 0x12000, scoped, tag = 'internal scratch']
  %s0 = inlined_call_operand.vmem [shape: f32[512,128], index: 0, kind: input, shape index: {}]
  %s1 = inlined_call_operand.vmem [shape: f32[1,128], index: 1, kind: input, shape index: {}]
  %s2 = inlined_call_operand.vmem [shape: f32[1,128], index: 2, kind: input, shape index: {}]
  %s3 = inlined_call_operand.vmem [shape: bf16[512,128], index: 3, kind: output, shape index: {}]
  %s4 = sld [smem:[#allocation0]]
  $region45: #{double_conv_forward.5} parent=0
    _
  %s6 = ssub.s32 1, %s4
  %s7 = scalar_select 0, %s6, %s4
  loop: start=0, step=1, limit=4
  $region2: #{double_conv_forward.5} parent=0 // loop_pre_header
    _
  $region3: #{double_conv_forward.5} parent=0 // loop_header
    %s9 = sphi 0, %s13
    %p10 = scmp.ge.s32.totalorder %s9, 4
    %s19 = sphi 0, %s21
    %s22 = sphi 0, %s19
    %s23 = sphi 0, %s22
    %s39 = sphi 0, %s23
    %s43 = sphi 0, %s43
    %s45 = sphi 0, %s43
    %s46 = sphi 0, %s45
    %s60 = sphi 0, %s46
    %s64 = sphi 0, %s64
    %s66 = sphi 0, %s64
    %s67 = sphi 0, %s66
    %s81 = sphi 0, %s67
    %s87 = sphi 0, %s89
    %s90 = sphi 0, %s87
    %s91 = sphi 0, %s90
    %s107 = sphi 0, %s91
  $region4: #{double_conv_forward.5} parent=0 // loop_header_branch
    %12 = sbr.rel (%p10) target = $region8
  $region5: #{double_conv_forward.5} parent=0 // loop_body
    %s14 = ssub.s32 %s9, 1
    %s15 = ssub.s32 %s9, 2
    %s16 = sadd.s32 %s9, 1
    %s17 = ssub.s32 %s9, %s16
    %p18 = scmp.eq.s32.totalorder %s17, 0
    %s20 = sadd.s32 %s19, 1
    %s21 = scalar_select %p18, %s19, %s20
    %p24 = pneg %p18
    %p25 = scmp.eq.s32.totalorder %s9, 1
    %p26 = por %p24, %p25
    %p27 = scmp.ne.s32.totalorder %s19, %s22
    %p28 = scmp.eq.s32.totalorder %s9, 0
    %p29 = por %p27, %p28
    %p30 = scmp.ne.s32.totalorder %s19, %s22
    %p31 = scmp.eq.s32.totalorder %s14, 1
    %p32 = por %p30, %p31
    %p33 = scmp.ne.s32.totalorder %s22, %s23
    %p34 = scmp.eq.s32.totalorder %s14, 0
    %p35 = por %p33, %p34
    %p36 = scmp.ne.s32.totalorder %s22, %s23
    %p37 = scmp.eq.s32.totalorder %s15, 1
    %p38 = por %p36, %p37
    %p40 = scmp.ne.s32.totalorder %s23, %s39
    %p41 = scmp.eq.s32.totalorder %s15, 0
    %p42 = por %p40, %p41
    %s44 = sadd.s32 %s43, 1
    %p47 = scmp.eq.s32.totalorder %s9, 1
    %p48 = scmp.ne.s32.totalorder %s43, %s45
    %p49 = scmp.eq.s32.totalorder %s9, 0
    %p50 = por %p48, %p49
    %p51 = scmp.ne.s32.totalorder %s43, %s45
    %p52 = scmp.eq.s32.totalorder %s14, 1
    %p53 = por %p51, %p52
    %p54 = scmp.ne.s32.totalorder %s45, %s46
    %p55 = scmp.eq.s32.totalorder %s14, 0
    %p56 = por %p54, %p55
    %p57 = scmp.ne.s32.totalorder %s45, %s46
    %p58 = scmp.eq.s32.totalorder %s15, 1
    %p59 = por %p57, %p58
    %p61 = scmp.ne.s32.totalorder %s46, %s60
    %p62 = scmp.eq.s32.totalorder %s15, 0
    %p63 = por %p61, %p62
    %s65 = sadd.s32 %s64, 1
    %p68 = scmp.eq.s32.totalorder %s9, 1
    %p69 = scmp.ne.s32.totalorder %s64, %s66
    %p70 = scmp.eq.s32.totalorder %s9, 0
    %p71 = por %p69, %p70
    %p72 = scmp.ne.s32.totalorder %s64, %s66
    %p73 = scmp.eq.s32.totalorder %s14, 1
    %p74 = por %p72, %p73
    %p75 = scmp.ne.s32.totalorder %s66, %s67
    %p76 = scmp.eq.s32.totalorder %s14, 0
    %p77 = por %p75, %p76
    %p78 = scmp.ne.s32.totalorder %s66, %s67
    %p79 = scmp.eq.s32.totalorder %s15, 1
    %p80 = por %p78, %p79
    %p82 = scmp.ne.s32.totalorder %s67, %s81
    %p83 = scmp.eq.s32.totalorder %s15, 0
    %p84 = por %p82, %p83
    %s85 = ssub.s32 %s9, %s16
    %p86 = scmp.eq.s32.totalorder %s85, 0
    %s88 = sadd.s32 %s87, 1
    %s89 = scalar_select %p86, %s87, %s88
    %p92 = pneg %p86
    %p93 = scmp.eq.s32.totalorder %s9, 1
    %p94 = por %p92, %p93
    %p95 = scmp.ne.s32.totalorder %s87, %s90
    %p96 = scmp.eq.s32.totalorder %s9, 0
    %p97 = por %p95, %p96
    %p98 = scmp.ne.s32.totalorder %s87, %s90
    %p99 = scmp.eq.s32.totalorder %s14, 1
    %p100 = por %p98, %p99
    %p101 = scmp.ne.s32.totalorder %s90, %s91
    %p102 = scmp.eq.s32.totalorder %s14, 0
    %p103 = por %p101, %p102
    %p104 = scmp.ne.s32.totalorder %s90, %s91
    %p105 = scmp.eq.s32.totalorder %s15, 1
    %p106 = por %p104, %p105
    %p108 = scmp.ne.s32.totalorder %s91, %s107
    %p109 = scmp.eq.s32.totalorder %s15, 0
    %p110 = por %p108, %p109
    %p111 = scmp.le.s32.totalorder 1, %s9
    %p112 = scmp.lt.s32.totalorder %s9, 3
    %p113 = pnand %p111, %p112
    %p114 = pneg %p113
    // Predicated region
    $region9: #{double_conv_forward.5} parent=5 // pred_check
      _
    $region10: #{double_conv_forward.5} parent=5 // pred_check_branch
      %116 = sbr.rel (%p113) target = $region12
    $region11: #{double_conv_forward.5} parent=5 // pred_region
      %s117 = ssub.s32 %s9, 1
      // Predicated region
      $region13: #{double_conv_forward.5} parent=11 // pred_check
        %p118 = pneg %p56
      $region14: #{double_conv_forward.5} parent=11 // pred_check_branch
        %120 = sbr.rel (%p118) target = $region16
      $region15: #{double_conv_forward.5} parent=11 // pred_region
        _
      $region16: #{double_conv_forward.5} parent=11 // pred_fallthru
        _
      // Predicated region
      $region17: #{double_conv_forward.5} parent=11 // pred_check
        %p121 = pneg %p77
      $region18: #{double_conv_forward.5} parent=11 // pred_check_branch
        %123 = sbr.rel (%p121) target = $region20
      $region19: #{double_conv_forward.5} parent=11 // pred_region
        _
      $region20: #{double_conv_forward.5} parent=11 // pred_fallthru
        _
    $region12: #{double_conv_forward.5} parent=5 // pred_fallthru
      _
    %p124 = scmp.lt.s32.totalorder %s9, 2
    // Predicated region
    $region21: #{double_conv_forward.5} parent=5 // pred_check
      %p125 = pneg %p124
    $region22: #{double_conv_forward.5} parent=5 // pred_check_branch
      %127 = sbr.rel (%p125) target = $region24
    $region23: #{double_conv_forward.5} parent=5 // pred_region
      // Predicated region
      $region25: #{double_conv_forward.5} parent=23 // pred_check
        %p128 = pneg %p29
      $region26: #{double_conv_forward.5} parent=23 // pred_check_branch
        %130 = sbr.rel (%p128) target = $region28
      $region27: #{double_conv_forward.5} parent=23 // pred_region
        %s131 = smul.u32 32, %s9
        %p132 = scmp.lt.s32.totalorder %s131, 63
        %s133 = scalar_select %p132, %s131, 63
        %s134 = smul.addr %s133, 8
        %s135 = scalar_lea.vmem %s0, %s134
        %s136 = smul.u32 32, %s9
      $region28: #{double_conv_forward.5} parent=23 // pred_fallthru
        _
    $region24: #{double_conv_forward.5} parent=5 // pred_fallthru
      _
    %p137 = scmp.le.s32.totalorder 1, %s9
    %p138 = scmp.lt.s32.totalorder %s9, 3
    %p139 = pnand %p137, %p138
    %p140 = pneg %p139
    // Predicated region
    $region29: #{double_conv_forward.5} parent=5 // pred_check
      _
    $region30: #{double_conv_forward.5} parent=5 // pred_check_branch
      %142 = sbr.rel (%p139) target = $region32
    $region31: #{double_conv_forward.5} parent=5 // pred_region
      %s143 = ssub.s32 %s9, 1
      %s144 = smul.u32 32, %s14
      %p145 = scmp.lt.s32.totalorder %s144, 63
      %s146 = scalar_select %p145, %s144, 63
      %s147 = smul.addr %s146, 8
      %s148 = scalar_lea.vmem %s0, %s147
      %p149 = pneg %p35
      %p150 = pneg %p32
      %p151 = pneg %p56
      %p152 = pneg %p53
      %p153 = pneg %p77
      %p154 = pneg %p74
      %p155 = pneg %p103
      %p156 = pneg %p100
      %s157 = smul.u32 32, %s14
      %p158 = scmp.lt.s32.totalorder %s157, 63
      %s159 = scalar_select %p158, %s157, 63
      %s160 = smul.addr %s159, 4
      %s161 = scalar_lea.vmem %s3, %s160
      %s162 = smul.u32 32, %s14
      %p163 = scmp.lt.s32.totalorder %s162, 63
      %s164 = scalar_select %p163, %s162, 63
      %s165 = smul.addr %s164, 8
      %s166 = scalar_lea.vmem %s0, %s165
      %s167 = smul.u32 32, %s14
      %s168 = smul.u32 32, %s14
      %p169 = scmp.lt.s32.totalorder %s168, 63
      %s170 = scalar_select %p169, %s168, 63
      %s171 = smul.addr %s170, 4
      %s172 = scalar_lea.vmem %s3, %s171
      %s173 = smul.u32 32, %s14
      %v174 = vld [vmem:[%s166] sm:$0xff]
      %v175 = vld [vmem:[%s166 + $0x8] sm:$0xff]
      %v176 = vld [vmem:[%s166 + $0x10] sm:$0xff]
      %v177 = vld [vmem:[%s166 + $0x18] sm:$0xff]
      %v178 = vld [vmem:[%s166 + $0x20] sm:$0xff]
      %v179 = vld [vmem:[%s166 + $0x28] sm:$0xff]
      %v180 = vld [vmem:[%s166 + $0x30] sm:$0xff]
      %v181 = vld [vmem:[%s166 + $0x38] sm:$0xff]
      %v182 = vld [vmem:[%s166 + $0x40] sm:$0xff]
      %v183 = vld [vmem:[%s166 + $0x48] sm:$0xff]
      %v184 = vld [vmem:[%s166 + $0x50] sm:$0xff]
      %v185 = vld [vmem:[%s166 + $0x58] sm:$0xff]
      %v186 = vld [vmem:[%s166 + $0x60] sm:$0xff]
      %v187 = vld [vmem:[%s166 + $0x68] sm:$0xff]
      %v188 = vld [vmem:[%s166 + $0x70] sm:$0xff]
      %v189 = vld [vmem:[%s166 + $0x78] sm:$0xff]
      %v190 = vld [vmem:[%s166 + $0x80] sm:$0xff]
      %v191 = vld [vmem:[%s166 + $0x88] sm:$0xff]
      %v192 = vld [vmem:[%s166 + $0x90] sm:$0xff]
      %v193 = vld [vmem:[%s166 + $0x98] sm:$0xff]
      %v194 = vld [vmem:[%s166 + $0xa0] sm:$0xff]
      %v195 = vld [vmem:[%s166 + $0xa8] sm:$0xff]
      %v196 = vld [vmem:[%s166 + $0xb0] sm:$0xff]
      %v197 = vld [vmem:[%s166 + $0xb8] sm:$0xff]
      %v198 = vld [vmem:[%s166 + $0xc0] sm:$0xff]
      %v199 = vld [vmem:[%s166 + $0xc8] sm:$0xff]
      %v200 = vld [vmem:[%s166 + $0xd0] sm:$0xff]
      %v201 = vld [vmem:[%s166 + $0xd8] sm:$0xff]
      %v202 = vld [vmem:[%s166 + $0xe0] sm:$0xff]
      %v203 = vld [vmem:[%s166 + $0xe8] sm:$0xff]
      %v204 = vld [vmem:[%s166 + $0xf0] sm:$0xff]
      %v205 = vld [vmem:[%s166 + $0xf8] sm:$0xff]
      %v206 = vld [vmem:[%s1] sm:$0x1]
      %v208 = vlaneseq
      %v209 = vshrl.u32 %v208, 7
      %v210 = vsub.s32 0, %v209
      %v211 = vrot.slane %v206, %v210
      %v213 = vmul.f32 %v174, %v211
      %v214 = vmul.f32 %v175, %v211
      %v215 = vmul.f32 %v176, %v211
      %v216 = vmul.f32 %v177, %v211
      %v217 = vmul.f32 %v178, %v211
      %v218 = vmul.f32 %v179, %v211
      %v219 = vmul.f32 %v180, %v211
      %v220 = vmul.f32 %v181, %v211
      %v221 = vmul.f32 %v182, %v211
      %v222 = vmul.f32 %v183, %v211
      %v223 = vmul.f32 %v184, %v211
      %v224 = vmul.f32 %v185, %v211
      %v225 = vmul.f32 %v186, %v211
      %v226 = vmul.f32 %v187, %v211
      %v227 = vmul.f32 %v188, %v211
      %v228 = vmul.f32 %v189, %v211
      %v229 = vmul.f32 %v190, %v211
      %v230 = vmul.f32 %v191, %v211
      %v231 = vmul.f32 %v192, %v211
      %v232 = vmul.f32 %v193, %v211
      %v233 = vmul.f32 %v194, %v211
      %v234 = vmul.f32 %v195, %v211
      %v235 = vmul.f32 %v196, %v211
      %v236 = vmul.f32 %v197, %v211
      %v237 = vmul.f32 %v198, %v211
      %v238 = vmul.f32 %v199, %v211
      %v239 = vmul.f32 %v200, %v211
      %v240 = vmul.f32 %v201, %v211
      %v241 = vmul.f32 %v202, %v211
      %v242 = vmul.f32 %v203, %v211
      %v243 = vmul.f32 %v204, %v211
      %v244 = vmul.f32 %v205, %v211
      %v245 = vld [vmem:[%s2] sm:$0x1]
      %v247 = vlaneseq
      %v248 = vshrl.u32 %v247, 7
      %v249 = vsub.s32 0, %v248
      %v250 = vrot.slane %v245, %v249
      %v252 = vadd.f32 %v213, %v250
      %v253 = vadd.f32 %v214, %v250
      %v254 = vadd.f32 %v215, %v250
      %v255 = vadd.f32 %v216, %v250
      %v256 = vadd.f32 %v217, %v250
      %v257 = vadd.f32 %v218, %v250
      %v258 = vadd.f32 %v219, %v250
      %v259 = vadd.f32 %v220, %v250
      %v260 = vadd.f32 %v221, %v250
      %v261 = vadd.f32 %v222, %v250
      %v262 = vadd.f32 %v223, %v250
      %v263 = vadd.f32 %v224, %v250
      %v264 = vadd.f32 %v225, %v250
      %v265 = vadd.f32 %v226, %v250
      %v266 = vadd.f32 %v227, %v250
      %v267 = vadd.f32 %v228, %v250
      %v268 = vadd.f32 %v229, %v250
      %v269 = vadd.f32 %v230, %v250
      %v270 = vadd.f32 %v231, %v250
      %v271 = vadd.f32 %v232, %v250
      %v272 = vadd.f32 %v233, %v250
      %v273 = vadd.f32 %v234, %v250
      %v274 = vadd.f32 %v235, %v250
      %v275 = vadd.f32 %v236, %v250
      %v276 = vadd.f32 %v237, %v250
      %v277 = vadd.f32 %v238, %v250
      %v278 = vadd.f32 %v239, %v250
      %v279 = vadd.f32 %v240, %v250
      %v280 = vadd.f32 %v241, %v250
      %v281 = vadd.f32 %v242, %v250
      %v282 = vadd.f32 %v243, %v250
      %v283 = vadd.f32 %v244, %v250
      %v284 = vmax.f32 %v252, 0.0
      %v285 = vmax.f32 %v253, 0.0
      %v286 = vmax.f32 %v254, 0.0
      %v287 = vmax.f32 %v255, 0.0
      %v288 = vmax.f32 %v256, 0.0
      %v289 = vmax.f32 %v257, 0.0
      %v290 = vmax.f32 %v258, 0.0
      %v291 = vmax.f32 %v259, 0.0
      %v292 = vmax.f32 %v260, 0.0
      %v293 = vmax.f32 %v261, 0.0
      %v294 = vmax.f32 %v262, 0.0
      %v295 = vmax.f32 %v263, 0.0
      %v296 = vmax.f32 %v264, 0.0
      %v297 = vmax.f32 %v265, 0.0
      %v298 = vmax.f32 %v266, 0.0
      %v299 = vmax.f32 %v267, 0.0
      %v300 = vmax.f32 %v268, 0.0
      %v301 = vmax.f32 %v269, 0.0
      %v302 = vmax.f32 %v270, 0.0
      %v303 = vmax.f32 %v271, 0.0
      %v304 = vmax.f32 %v272, 0.0
      %v305 = vmax.f32 %v273, 0.0
      %v306 = vmax.f32 %v274, 0.0
      %v307 = vmax.f32 %v275, 0.0
      %v308 = vmax.f32 %v276, 0.0
      %v309 = vmax.f32 %v277, 0.0
      %v310 = vmax.f32 %v278, 0.0
      %v311 = vmax.f32 %v279, 0.0
      %v312 = vmax.f32 %v280, 0.0
      %v313 = vmax.f32 %v281, 0.0
      %v314 = vmax.f32 %v282, 0.0
      %v315 = vmax.f32 %v283, 0.0
      %v316 = vpack.c.bf16 %v285, %v284
      %v317 = vpack.c.bf16 %v287, %v286
      %v318 = vpack.c.bf16 %v289, %v288
      %v319 = vpack.c.bf16 %v291, %v290
      %v320 = vpack.c.bf16 %v293, %v292
      %v321 = vpack.c.bf16 %v295, %v294
      %v322 = vpack.c.bf16 %v297, %v296
      %v323 = vpack.c.bf16 %v299, %v298
      %v324 = vpack.c.bf16 %v301, %v300
      %v325 = vpack.c.bf16 %v303, %v302
      %v326 = vpack.c.bf16 %v305, %v304
      %v327 = vpack.c.bf16 %v307, %v306
      %v328 = vpack.c.bf16 %v309, %v308
      %v329 = vpack.c.bf16 %v311, %v310
      %v330 = vpack.c.bf16 %v313, %v312
      %v331 = vpack.c.bf16 %v315, %v314
      %v348 = vunpack.c.l.b16 %v316
      %v349 = vunpack.c.h.b16 %v316
      %v350 = vunpack.c.l.b16 %v317
      %v351 = vunpack.c.h.b16 %v317
      %v352 = vunpack.c.l.b16 %v318
      %v353 = vunpack.c.h.b16 %v318
      %v354 = vunpack.c.l.b16 %v319
      %v355 = vunpack.c.h.b16 %v319
      %v356 = vunpack.c.l.b16 %v320
      %v357 = vunpack.c.h.b16 %v320
      %v358 = vunpack.c.l.b16 %v321
      %v359 = vunpack.c.h.b16 %v321
      %v360 = vunpack.c.l.b16 %v322
      %v361 = vunpack.c.h.b16 %v322
      %v362 = vunpack.c.l.b16 %v323
      %v363 = vunpack.c.h.b16 %v323
      %v364 = vunpack.c.l.b16 %v324
      %v365 = vunpack.c.h.b16 %v324
      %v366 = vunpack.c.l.b16 %v325
      %v367 = vunpack.c.h.b16 %v325
      %v368 = vunpack.c.l.b16 %v326
      %v369 = vunpack.c.h.b16 %v326
      %v370 = vunpack.c.l.b16 %v327
      %v371 = vunpack.c.h.b16 %v327
      %v372 = vunpack.c.l.b16 %v328
      %v373 = vunpack.c.h.b16 %v328
      %v374 = vunpack.c.l.b16 %v329
      %v375 = vunpack.c.h.b16 %v329
      %v376 = vunpack.c.l.b16 %v330
      %v377 = vunpack.c.h.b16 %v330
      %v378 = vunpack.c.l.b16 %v331
      %v379 = vunpack.c.h.b16 %v331
      %v380 = vpack.c.b16 %v348, %v348
      %v381 = vpack.c.b16 %v349, %v349
      %v382 = vpack.c.b16 %v350, %v350
      %v383 = vpack.c.b16 %v351, %v351
      %v384 = vpack.c.b16 %v352, %v352
      %v385 = vpack.c.b16 %v353, %v353
      %v386 = vpack.c.b16 %v354, %v354
      %v387 = vpack.c.b16 %v355, %v355
      %v388 = vpack.c.b16 %v356, %v356
      %v389 = vpack.c.b16 %v357, %v357
      %v390 = vpack.c.b16 %v358, %v358
      %v391 = vpack.c.b16 %v359, %v359
      %v392 = vpack.c.b16 %v360, %v360
      %v393 = vpack.c.b16 %v361, %v361
      %v394 = vpack.c.b16 %v362, %v362
      %v395 = vpack.c.b16 %v363, %v363
      %v396 = vpack.c.b16 %v364, %v364
      %v397 = vpack.c.b16 %v365, %v365
      %v398 = vpack.c.b16 %v366, %v366
      %v399 = vpack.c.b16 %v367, %v367
      %v400 = vpack.c.b16 %v368, %v368
      %v401 = vpack.c.b16 %v369, %v369
      %v402 = vpack.c.b16 %v370, %v370
      %v403 = vpack.c.b16 %v371, %v371
      %v404 = vpack.c.b16 %v372, %v372
      %v405 = vpack.c.b16 %v373, %v373
      %v406 = vpack.c.b16 %v374, %v374
      %v407 = vpack.c.b16 %v375, %v375
      %v408 = vpack.c.b16 %v376, %v376
      %v409 = vpack.c.b16 %v377, %v377
      %v410 = vpack.c.b16 %v378, %v378
      %v411 = vpack.c.b16 %v379, %v379
      %444 = vst [vmem:[%s172] sm:$0xf] %v380
      %445 = vst [vmem:[%s172 + $0x4] sm:$0xf] %v381
      %446 = vst [vmem:[%s172 + $0x8] sm:$0xf] %v382
      %447 = vst [vmem:[%s172 + $0xc] sm:$0xf] %v383
      %448 = vst [vmem:[%s172 + $0x10] sm:$0xf] %v384
      %449 = vst [vmem:[%s172 + $0x14] sm:$0xf] %v385
      %450 = vst [vmem:[%s172 + $0x18] sm:$0xf] %v386
      %451 = vst [vmem:[%s172 + $0x1c] sm:$0xf] %v387
      %452 = vst [vmem:[%s172 + $0x20] sm:$0xf] %v388
      %453 = vst [vmem:[%s172 + $0x24] sm:$0xf] %v389
      %454 = vst [vmem:[%s172 + $0x28] sm:$0xf] %v390
      %455 = vst [vmem:[%s172 + $0x2c] sm:$0xf] %v391
      %456 = vst [vmem:[%s172 + $0x30] sm:$0xf] %v392
      %457 = vst [vmem:[%s172 + $0x34] sm:$0xf] %v393
      %458 = vst [vmem:[%s172 + $0x38] sm:$0xf] %v394
      %459 = vst [vmem:[%s172 + $0x3c] sm:$0xf] %v395
      %460 = vst [vmem:[%s172 + $0x40] sm:$0xf] %v396
      %461 = vst [vmem:[%s172 + $0x44] sm:$0xf] %v397
      %462 = vst [vmem:[%s172 + $0x48] sm:$0xf] %v398
      %463 = vst [vmem:[%s172 + $0x4c] sm:$0xf] %v399
      %464 = vst [vmem:[%s172 + $0x50] sm:$0xf] %v400
      %465 = vst [vmem:[%s172 + $0x54] sm:$0xf] %v401
      %466 = vst [vmem:[%s172 + $0x58] sm:$0xf] %v402
      %467 = vst [vmem:[%s172 + $0x5c] sm:$0xf] %v403
      %468 = vst [vmem:[%s172 + $0x60] sm:$0xf] %v404
      %469 = vst [vmem:[%s172 + $0x64] sm:$0xf] %v405
      %470 = vst [vmem:[%s172 + $0x68] sm:$0xf] %v406
      %471 = vst [vmem:[%s172 + $0x6c] sm:$0xf] %v407
      %472 = vst [vmem:[%s172 + $0x70] sm:$0xf] %v408
      %473 = vst [vmem:[%s172 + $0x74] sm:$0xf] %v409
      %474 = vst [vmem:[%s172 + $0x78] sm:$0xf] %v410
      %475 = vst [vmem:[%s172 + $0x7c] sm:$0xf] %v411
      %s476 = smul.u32 32, %s14
      %p477 = scmp.lt.s32.totalorder %s476, 63
      %s478 = scalar_select %p477, %s476, 63
      %s479 = smul.addr %s478, 4
      %s480 = scalar_lea.vmem %s3, %s479
      // Predicated region
      $region33: #{double_conv_forward.5} parent=31 // pred_check
        %p481 = pneg %p100
      $region34: #{double_conv_forward.5} parent=31 // pred_check_branch
        %483 = sbr.rel (%p481) target = $region36
      $region35: #{double_conv_forward.5} parent=31 // pred_region
        %s484 = smul.u32 32, %s14
      $region36: #{double_conv_forward.5} parent=31 // pred_fallthru
        _
    $region32: #{double_conv_forward.5} parent=5 // pred_fallthru
      _
    %p485 = scmp.le.s32.totalorder 2, %s9
    // Predicated region
    $region37: #{double_conv_forward.5} parent=5 // pred_check
      %p486 = pneg %p485
    $region38: #{double_conv_forward.5} parent=5 // pred_check_branch
      %488 = sbr.rel (%p486) target = $region40
    $region39: #{double_conv_forward.5} parent=5 // pred_region
      %s489 = ssub.s32 %s9, 2
      // Predicated region
      $region41: #{double_conv_forward.5} parent=39 // pred_check
        %p490 = pneg %p106
      $region42: #{double_conv_forward.5} parent=39 // pred_check_branch
        %492 = sbr.rel (%p490) target = $region44
      $region43: #{double_conv_forward.5} parent=39 // pred_region
        %s493 = smul.u32 32, %s15
        %p494 = scmp.lt.s32.totalorder %s493, 63
        %s495 = scalar_select %p494, %s493, 63
        %s496 = smul.addr %s495, 4
        %s497 = scalar_lea.vmem %s3, %s496
      $region44: #{double_conv_forward.5} parent=39 // pred_fallthru
        _
    $region40: #{double_conv_forward.5} parent=5 // pred_fallthru
      _
  $region6: #{double_conv_forward.5} parent=0 // loop_footer
    %s13 = sadd.s32 1, %s9
  $region7: #{double_conv_forward.5} parent=0 // loop_footer_branch
    %8 = sbr.rel target = $region3
  $region8: #{double_conv_forward.5} parent=0 // loop_exit
    _

</llo_original>
